<compile_context>
chip_gen: v5e
topology: v5e:2x2
jax: 0.10.0
libtpu: 0.0.40
codegen_flags: <defaults>
</compile_context>

<pallas_src>
from functools import partial

import jax
import jax.numpy as jnp
from jax.experimental import pallas as pl
from jax.experimental.pallas import tpu as pltpu


def _mhsa_kernel(x_ref, wqkv_ref, bqkv_ref, wo_ref, bo_ref, o_ref, *,
                 num_heads, seq_len):
    M, E = x_ref.shape                 # M = bt * seq_len rows of flattened (B*L, E) input
    L = seq_len
    bt = M // L                        # batch rows folded into this block
    H = num_heads
    dh = E // H
    scale = 1.0 / float(dh) ** 0.5

    x = x_ref[...]                                               # (M, E) f32

    # Fused QKV projection: one wide MXU matmul (N = 3E), weights pre-transposed.
    qkv = jnp.dot(x, wqkv_ref[...],
                  preferred_element_type=jnp.float32) + bqkv_ref[...]
    q = qkv[:, 0 * E:1 * E] * scale
    k = qkv[:, 1 * E:2 * E]
    v = qkv[:, 2 * E:3 * E]

    # Head-major layout (bt*H, L, dh): static slices, unrolled at trace time.
    def split_heads(t):
        return jnp.stack(
            [t[b * L:(b + 1) * L, h * dh:(h + 1) * dh]
             for b in range(bt) for h in range(H)],
            axis=0)

    qh, kh, vh = split_heads(q), split_heads(k), split_heads(v)

    # Batched attention: a single q@k^T and a single p@v over z = bt*H heads.
    # (For long L this block would become a flash-style KV-tiled online softmax.)
    s = jnp.einsum("zqd,zkd->zqk", qh, kh, preferred_element_type=jnp.float32)
    s = s - jnp.max(s, axis=-1, keepdims=True)
    p = jnp.exp(s)
    # EUP approx reciprocal instead of a VALU divide for the softmax denom.
    p = p * pl.reciprocal(jnp.sum(p, axis=-1, keepdims=True), approx=True)
    ctx = jnp.einsum("zqk,zkd->zqd", p, vh,
                     preferred_element_type=jnp.float32)         # (bt*H, L, dh)

    # Merge heads back to (M, E): heads along lanes, batch rows along sublanes.
    rows = [jnp.concatenate([ctx[b * H + h] for h in range(H)], axis=-1)
            for b in range(bt)]
    merged = rows[0] if bt == 1 else jnp.concatenate(rows, axis=0)

    out = jnp.dot(merged, wo_ref[...],
                  preferred_element_type=jnp.float32) + bo_ref[...]
    o_ref[...] = out.astype(o_ref.dtype)


def _pick_batch_tile(B, L, E, act_budget_bytes=1 << 20):
    """Largest batch tile that divides B, keeps >=2 grid steps (both v7x TCs
    busy), and keeps the per-step activation block under ~1 MiB of f32."""
    if B < 2:
        return 1
    best = 1
    for bt in range(1, B // 2 + 1):
        if B % bt == 0 and bt * L * E * 4 <= act_budget_bytes:
            best = bt
    return best


def _build_call(nb, M, L, E, H, dtype, weight_pipeline_mode):
    def wspec(shape):
        if weight_pipeline_mode is None:
            return pl.BlockSpec(shape, lambda i: (0, 0))
        return pl.BlockSpec(shape, lambda i: (0, 0),
                            pipeline_mode=weight_pipeline_mode)

    kernel = partial(_mhsa_kernel, num_heads=H, seq_len=L)
    return pl.pallas_call(
        kernel,
        out_shape=jax.ShapeDtypeStruct((nb * M, E), dtype),
        grid=(nb,),
        in_specs=[
            pl.BlockSpec((M, E), lambda i: (i, 0)),   # x rows (bt*L per step)
            wspec((E, 3 * E)),                        # fused W_qkv^T (grid-invariant)
            wspec((1, 3 * E)),                        # fused qkv bias
            wspec((E, E)),                            # W_o^T
            wspec((1, E)),                            # out bias
        ],
        out_specs=pl.BlockSpec((M, E), lambda i: (i, 0)),
        # NOTE: for production-size E on v7x (64 MiB VMEM), also set
        # vmem_limit_bytes and/or tile the weights over their N dim.
        compiler_params=pltpu.CompilerParams(
            dimension_semantics=("parallel",)),
    )


def multi_self_att(x, params, num_heads, batch_tile=None):
    """x: (B, L, E) float32. params: (wq, wk, wv, bq, bk, bv, wo, bo) with the
    nn.Linear convention y = x @ W^T + b (as in nn.MultiheadAttention)."""
    B, L, E = x.shape
    assert E % num_heads == 0
    wq, wk, wv, bq, bk, bv, wo, bo = params

    # Fuse + pre-transpose projection weights once, outside the kernel.
    wqkv_t = jnp.concatenate([wq, wk, wv], axis=0).T          # (E, 3E)
    bqkv = jnp.concatenate([bq, bk, bv]).reshape(1, 3 * E)    # (1, 3E)
    wo_t = wo.T                                               # (E, E)
    bo2 = bo.reshape(1, E)                                    # (1, E)

    bt = batch_tile or _pick_batch_tile(B, L, E)
    assert B % bt == 0
    nb = B // bt
    M = bt * L
    x2 = x.reshape(B * L, E)
    args = (x2, wqkv_t, bqkv, wo_t, bo2)

    try:
        out = _build_call(nb, M, L, E, num_heads, x.dtype, pl.Buffered(1))(*args)
    except Exception:
        # pipeline_mode / Buffered(1) not supported by this jax build:
        # fall back to default double-buffered weight blocks.
        out = _build_call(nb, M, L, E, num_heads, x.dtype, None)(*args)
    return out.reshape(B, L, E)


def _reference(x, params, num_heads):
    wq, wk, wv, bq, bk, bv, wo, bo = params
    B, L, E = x.shape
    dh = E // num_heads
    q = x @ wq.T + bq
    k = x @ wk.T + bk
    v = x @ wv.T + bv
    q = q.reshape(B, L, num_heads, dh).transpose(0, 2, 1, 3)
    k = k.reshape(B, L, num_heads, dh).transpose(0, 2, 1, 3)
    v = v.reshape(B, L, num_heads, dh).transpose(0, 2, 1, 3)
    s = jnp.einsum("bhqd,bhkd->bhqk", q, k) / jnp.sqrt(jnp.float32(dh))
    p = jax.nn.softmax(s, axis=-1)
    ctx = jnp.einsum("bhqk,bhkd->bhqd", p, v)
    ctx = ctx.transpose(0, 2, 1, 3).reshape(B, L, E)
    return ctx @ wo.T + bo


if __name__ == "__main__":
    B, L, E, H = 4, 8, 32, 4  # batch, seq, hidden_dim, num_heads

    key = jax.random.PRNGKey(0)
    kx, kqkv, kb, ko, kob = jax.random.split(key, 5)

    x = jax.random.normal(kx, (B, L, E), dtype=jnp.float32)

    # nn.MultiheadAttention params: in_proj_weight (3E, E), in_proj_bias (3E,),
    # out_proj.weight (E, E), out_proj.bias (E,). Deterministic synthetic init.
    in_proj_w = jax.random.uniform(kqkv, (3 * E, E), jnp.float32, -0.1, 0.1)
    in_proj_b = jax.random.uniform(kb, (3 * E,), jnp.float32, -0.1, 0.1)
    wo = jax.random.uniform(ko, (E, E), jnp.float32, -0.1, 0.1)
    bo = jax.random.uniform(kob, (E,), jnp.float32, -0.1, 0.1)

    wq, wk, wv = in_proj_w[:E], in_proj_w[E:2 * E], in_proj_w[2 * E:]
    bq, bk, bv = in_proj_b[:E], in_proj_b[E:2 * E], in_proj_b[2 * E:]
    params = (wq, wk, wv, bq, bk, bv, wo, bo)

    out = multi_self_att(x, params, H)
    out = jax.block_until_ready(out)

    ref = _reference(x, params, H)
    assert out.shape == ref.shape
    # Tolerance loosened from 1e-5 to cover the EUP approx-reciprocal used in
    # the in-kernel softmax normalization.
    assert jnp.allclose(out, ref, atol=2e-3, rtol=2e-3), "mismatch vs reference"

    print("KERNEL_OK")
</pallas_src>

<mosaic_0001>
module attributes {stable_mosaic.version = 11 : i64} {
  func.func @_mhsa_kernel(%arg0: i32, %arg1: memref<16x32xf32, #tpu.memory_space<vmem>>, %arg2: memref<32x96xf32, #tpu.memory_space<vmem>>, %arg3: memref<1x96xf32, #tpu.memory_space<vmem>>, %arg4: memref<32x32xf32, #tpu.memory_space<vmem>>, %arg5: memref<1x32xf32, #tpu.memory_space<vmem>>, %arg6: memref<16x32xf32, #tpu.memory_space<vmem>>) attributes {dimension_semantics = [#tpu.dimension_semantics<parallel>], iteration_bounds = array<i64: 2>, scalar_prefetch = 0 : i64, scratch_operands = 0 : i64, tpu.core_type = #tpu.core_type<tc>, window_params = [{transform_indices = @transform_0, window_bounds = array<i64: 16, 32>}, {pipeline_mode = #tpu.pipeline_mode<synchronous>, transform_indices = @transform_1, window_bounds = array<i64: 32, 96>}, {pipeline_mode = #tpu.pipeline_mode<synchronous>, transform_indices = @transform_2, window_bounds = array<i64: 1, 96>}, {pipeline_mode = #tpu.pipeline_mode<synchronous>, transform_indices = @transform_3, window_bounds = array<i64: 32, 32>}, {pipeline_mode = #tpu.pipeline_mode<synchronous>, transform_indices = @transform_4, window_bounds = array<i64: 1, 32>}, {transform_indices = @transform_5, window_bounds = array<i64: 16, 32>}]} {
    %c0 = arith.constant 0 : index
    %c0_0 = arith.constant 0 : index
    %0 = vector.load %arg1[%c0, %c0_0] : memref<16x32xf32, #tpu.memory_space<vmem>>, vector<16x32xf32>
    %c0_1 = arith.constant 0 : index
    %c0_2 = arith.constant 0 : index
    %1 = vector.load %arg2[%c0_1, %c0_2] : memref<32x96xf32, #tpu.memory_space<vmem>>, vector<32x96xf32>
    %cst = arith.constant dense<0.000000e+00> : vector<16x96xf32>
    %2 = tpu.matmul %0, %1, %cst {dimension_numbers = #tpu.dot_dimension_numbers<[1], [0], [0], [1], [0, 0, 1, 1], [], []>} : vector<16x32xf32>, vector<32x96xf32>, vector<16x96xf32> -> vector<16x96xf32>
    %c0_3 = arith.constant 0 : index
    %c0_4 = arith.constant 0 : index
    %3 = vector.load %arg3[%c0_3, %c0_4] : memref<1x96xf32, #tpu.memory_space<vmem>>, vector<1x96xf32>
    %4 = vector.broadcast %3 : vector<1x96xf32> to vector<16x96xf32>
    %5 = arith.addf %2, %4 : vector<16x96xf32>
    %6 = vector.extract_strided_slice %5 {offsets = [0, 0], sizes = [16, 32], strides = [1, 1]} : vector<16x96xf32> to vector<16x32xf32>
    %cst_5 = arith.constant 0.353553385 : f32
    %7 = vector.broadcast %cst_5 : f32 to vector<16x32xf32>
    %8 = arith.mulf %6, %7 : vector<16x32xf32>
    %9 = vector.extract_strided_slice %5 {offsets = [0, 32], sizes = [16, 32], strides = [1, 1]} : vector<16x96xf32> to vector<16x32xf32>
    %10 = vector.extract_strided_slice %5 {offsets = [0, 64], sizes = [16, 32], strides = [1, 1]} : vector<16x96xf32> to vector<16x32xf32>
    %11 = vector.extract_strided_slice %8 {offsets = [0, 0], sizes = [8, 8], strides = [1, 1]} : vector<16x32xf32> to vector<8x8xf32>
    %12 = vector.extract_strided_slice %8 {offsets = [0, 8], sizes = [8, 8], strides = [1, 1]} : vector<16x32xf32> to vector<8x8xf32>
    %13 = vector.extract_strided_slice %8 {offsets = [0, 16], sizes = [8, 8], strides = [1, 1]} : vector<16x32xf32> to vector<8x8xf32>
    %14 = vector.extract_strided_slice %8 {offsets = [0, 24], sizes = [8, 8], strides = [1, 1]} : vector<16x32xf32> to vector<8x8xf32>
    %15 = vector.extract_strided_slice %8 {offsets = [8, 0], sizes = [8, 8], strides = [1, 1]} : vector<16x32xf32> to vector<8x8xf32>
    %16 = vector.extract_strided_slice %8 {offsets = [8, 8], sizes = [8, 8], strides = [1, 1]} : vector<16x32xf32> to vector<8x8xf32>
    %17 = vector.extract_strided_slice %8 {offsets = [8, 16], sizes = [8, 8], strides = [1, 1]} : vector<16x32xf32> to vector<8x8xf32>
    %18 = vector.extract_strided_slice %8 {offsets = [8, 24], sizes = [8, 8], strides = [1, 1]} : vector<16x32xf32> to vector<8x8xf32>
    %19 = vector.shape_cast %11 : vector<8x8xf32> to vector<1x8x8xf32>
    %20 = vector.shape_cast %12 : vector<8x8xf32> to vector<1x8x8xf32>
    %21 = vector.shape_cast %13 : vector<8x8xf32> to vector<1x8x8xf32>
    %22 = vector.shape_cast %14 : vector<8x8xf32> to vector<1x8x8xf32>
    %23 = vector.shape_cast %15 : vector<8x8xf32> to vector<1x8x8xf32>
    %24 = vector.shape_cast %16 : vector<8x8xf32> to vector<1x8x8xf32>
    %25 = vector.shape_cast %17 : vector<8x8xf32> to vector<1x8x8xf32>
    %26 = vector.shape_cast %18 : vector<8x8xf32> to vector<1x8x8xf32>
    %27 = tpu.concatenate %19, %20, %21, %22, %23, %24, %25, %26 in 0 : vector<1x8x8xf32>, vector<1x8x8xf32>, vector<1x8x8xf32>, vector<1x8x8xf32>, vector<1x8x8xf32>, vector<1x8x8xf32>, vector<1x8x8xf32>, vector<1x8x8xf32> -> vector<8x8x8xf32>
    %28 = vector.extract_strided_slice %9 {offsets = [0, 0], sizes = [8, 8], strides = [1, 1]} : vector<16x32xf32> to vector<8x8xf32>
    %29 = vector.extract_strided_slice %9 {offsets = [0, 8], sizes = [8, 8], strides = [1, 1]} : vector<16x32xf32> to vector<8x8xf32>
    %30 = vector.extract_strided_slice %9 {offsets = [0, 16], sizes = [8, 8], strides = [1, 1]} : vector<16x32xf32> to vector<8x8xf32>
    %31 = vector.extract_strided_slice %9 {offsets = [0, 24], sizes = [8, 8], strides = [1, 1]} : vector<16x32xf32> to vector<8x8xf32>
    %32 = vector.extract_strided_slice %9 {offsets = [8, 0], sizes = [8, 8], strides = [1, 1]} : vector<16x32xf32> to vector<8x8xf32>
    %33 = vector.extract_strided_slice %9 {offsets = [8, 8], sizes = [8, 8], strides = [1, 1]} : vector<16x32xf32> to vector<8x8xf32>
    %34 = vector.extract_strided_slice %9 {offsets = [8, 16], sizes = [8, 8], strides = [1, 1]} : vector<16x32xf32> to vector<8x8xf32>
    %35 = vector.extract_strided_slice %9 {offsets = [8, 24], sizes = [8, 8], strides = [1, 1]} : vector<16x32xf32> to vector<8x8xf32>
    %36 = vector.shape_cast %28 : vector<8x8xf32> to vector<1x8x8xf32>
    %37 = vector.shape_cast %29 : vector<8x8xf32> to vector<1x8x8xf32>
    %38 = vector.shape_cast %30 : vector<8x8xf32> to vector<1x8x8xf32>
    %39 = vector.shape_cast %31 : vector<8x8xf32> to vector<1x8x8xf32>
    %40 = vector.shape_cast %32 : vector<8x8xf32> to vector<1x8x8xf32>
    %41 = vector.shape_cast %33 : vector<8x8xf32> to vector<1x8x8xf32>
    %42 = vector.shape_cast %34 : vector<8x8xf32> to vector<1x8x8xf32>
    %43 = vector.shape_cast %35 : vector<8x8xf32> to vector<1x8x8xf32>
    %44 = tpu.concatenate %36, %37, %38, %39, %40, %41, %42, %43 in 0 : vector<1x8x8xf32>, vector<1x8x8xf32>, vector<1x8x8xf32>, vector<1x8x8xf32>, vector<1x8x8xf32>, vector<1x8x8xf32>, vector<1x8x8xf32>, vector<1x8x8xf32> -> vector<8x8x8xf32>
    %45 = vector.extract_strided_slice %10 {offsets = [0, 0], sizes = [8, 8], strides = [1, 1]} : vector<16x32xf32> to vector<8x8xf32>
    %46 = vector.extract_strided_slice %10 {offsets = [0, 8], sizes = [8, 8], strides = [1, 1]} : vector<16x32xf32> to vector<8x8xf32>
    %47 = vector.extract_strided_slice %10 {offsets = [0, 16], sizes = [8, 8], strides = [1, 1]} : vector<16x32xf32> to vector<8x8xf32>
    %48 = vector.extract_strided_slice %10 {offsets = [0, 24], sizes = [8, 8], strides = [1, 1]} : vector<16x32xf32> to vector<8x8xf32>
    %49 = vector.extract_strided_slice %10 {offsets = [8, 0], sizes = [8, 8], strides = [1, 1]} : vector<16x32xf32> to vector<8x8xf32>
    %50 = vector.extract_strided_slice %10 {offsets = [8, 8], sizes = [8, 8], strides = [1, 1]} : vector<16x32xf32> to vector<8x8xf32>
    %51 = vector.extract_strided_slice %10 {offsets = [8, 16], sizes = [8, 8], strides = [1, 1]} : vector<16x32xf32> to vector<8x8xf32>
    %52 = vector.extract_strided_slice %10 {offsets = [8, 24], sizes = [8, 8], strides = [1, 1]} : vector<16x32xf32> to vector<8x8xf32>
    %53 = vector.shape_cast %45 : vector<8x8xf32> to vector<1x8x8xf32>
    %54 = vector.shape_cast %46 : vector<8x8xf32> to vector<1x8x8xf32>
    %55 = vector.shape_cast %47 : vector<8x8xf32> to vector<1x8x8xf32>
    %56 = vector.shape_cast %48 : vector<8x8xf32> to vector<1x8x8xf32>
    %57 = vector.shape_cast %49 : vector<8x8xf32> to vector<1x8x8xf32>
    %58 = vector.shape_cast %50 : vector<8x8xf32> to vector<1x8x8xf32>
    %59 = vector.shape_cast %51 : vector<8x8xf32> to vector<1x8x8xf32>
    %60 = vector.shape_cast %52 : vector<8x8xf32> to vector<1x8x8xf32>
    %61 = tpu.concatenate %53, %54, %55, %56, %57, %58, %59, %60 in 0 : vector<1x8x8xf32>, vector<1x8x8xf32>, vector<1x8x8xf32>, vector<1x8x8xf32>, vector<1x8x8xf32>, vector<1x8x8xf32>, vector<1x8x8xf32>, vector<1x8x8xf32> -> vector<8x8x8xf32>
    "tpu.trace_start"() <{level = 10 : i32, message = "zqd,zkd->zqk"}> : () -> ()
    %cst_6 = arith.constant dense<0.000000e+00> : vector<8x8x8xf32>
    %62 = tpu.matmul %27, %44, %cst_6 {dimension_numbers = #tpu.dot_dimension_numbers<[2], [2], [1], [1], [0, 0, 0, 1, 1, 1], [0], [0]>} : vector<8x8x8xf32>, vector<8x8x8xf32>, vector<8x8x8xf32> -> vector<8x8x8xf32>
    "tpu.trace_stop"() : () -> ()
    %cst_7 = arith.constant dense<0xFF800000> : vector<8x8xf32>
    %63 = vector.multi_reduction <maximumf>, %62, %cst_7 [2] : vector<8x8x8xf32> to vector<8x8xf32>
    %64 = vector.shape_cast %63 : vector<8x8xf32> to vector<8x8x1xf32>
    %65 = vector.broadcast %64 : vector<8x8x1xf32> to vector<8x8x8xf32>
    %66 = arith.subf %62, %65 : vector<8x8x8xf32>
    %67 = math.exp %66 : vector<8x8x8xf32>
    %cst_8 = arith.constant dense<0.000000e+00> : vector<8x8xf32>
    %68 = vector.multi_reduction <add>, %67, %cst_8 [2] : vector<8x8x8xf32> to vector<8x8xf32>
    %69 = vector.shape_cast %68 : vector<8x8xf32> to vector<8x8x1xf32>
    %70 = tpu.reciprocal %69 {approx = true} : vector<8x8x1xf32> -> vector<8x8x1xf32>
    %71 = vector.broadcast %70 : vector<8x8x1xf32> to vector<8x8x8xf32>
    %72 = arith.mulf %67, %71 : vector<8x8x8xf32>
    "tpu.trace_start"() <{level = 10 : i32, message = "zqk,zkd->zqd"}> : () -> ()
    %cst_9 = arith.constant dense<0.000000e+00> : vector<8x8x8xf32>
    %73 = tpu.matmul %72, %61, %cst_9 {dimension_numbers = #tpu.dot_dimension_numbers<[2], [1], [1], [2], [0, 0, 0, 1, 1, 2], [0], [0]>} : vector<8x8x8xf32>, vector<8x8x8xf32>, vector<8x8x8xf32> -> vector<8x8x8xf32>
    "tpu.trace_stop"() : () -> ()
    %74 = vector.extract_strided_slice %73 {offsets = [0, 0, 0], sizes = [1, 8, 8], strides = [1, 1, 1]} : vector<8x8x8xf32> to vector<1x8x8xf32>
    %75 = vector.shape_cast %74 : vector<1x8x8xf32> to vector<8x8xf32>
    %76 = vector.extract_strided_slice %73 {offsets = [1, 0, 0], sizes = [1, 8, 8], strides = [1, 1, 1]} : vector<8x8x8xf32> to vector<1x8x8xf32>
    %77 = vector.shape_cast %76 : vector<1x8x8xf32> to vector<8x8xf32>
    %78 = vector.extract_strided_slice %73 {offsets = [2, 0, 0], sizes = [1, 8, 8], strides = [1, 1, 1]} : vector<8x8x8xf32> to vector<1x8x8xf32>
    %79 = vector.shape_cast %78 : vector<1x8x8xf32> to vector<8x8xf32>
    %80 = vector.extract_strided_slice %73 {offsets = [3, 0, 0], sizes = [1, 8, 8], strides = [1, 1, 1]} : vector<8x8x8xf32> to vector<1x8x8xf32>
    %81 = vector.shape_cast %80 : vector<1x8x8xf32> to vector<8x8xf32>
    %82 = tpu.concatenate %75, %77, %79, %81 in 1 : vector<8x8xf32>, vector<8x8xf32>, vector<8x8xf32>, vector<8x8xf32> -> vector<8x32xf32>
    %83 = vector.extract_strided_slice %73 {offsets = [4, 0, 0], sizes = [1, 8, 8], strides = [1, 1, 1]} : vector<8x8x8xf32> to vector<1x8x8xf32>
    %84 = vector.shape_cast %83 : vector<1x8x8xf32> to vector<8x8xf32>
    %85 = vector.extract_strided_slice %73 {offsets = [5, 0, 0], sizes = [1, 8, 8], strides = [1, 1, 1]} : vector<8x8x8xf32> to vector<1x8x8xf32>
    %86 = vector.shape_cast %85 : vector<1x8x8xf32> to vector<8x8xf32>
    %87 = vector.extract_strided_slice %73 {offsets = [6, 0, 0], sizes = [1, 8, 8], strides = [1, 1, 1]} : vector<8x8x8xf32> to vector<1x8x8xf32>
    %88 = vector.shape_cast %87 : vector<1x8x8xf32> to vector<8x8xf32>
    %89 = vector.extract_strided_slice %73 {offsets = [7, 0, 0], sizes = [1, 8, 8], strides = [1, 1, 1]} : vector<8x8x8xf32> to vector<1x8x8xf32>
    %90 = vector.shape_cast %89 : vector<1x8x8xf32> to vector<8x8xf32>
    %91 = tpu.concatenate %84, %86, %88, %90 in 1 : vector<8x8xf32>, vector<8x8xf32>, vector<8x8xf32>, vector<8x8xf32> -> vector<8x32xf32>
    %92 = tpu.concatenate %82, %91 in 0 : vector<8x32xf32>, vector<8x32xf32> -> vector<16x32xf32>
    %c0_10 = arith.constant 0 : index
    %c0_11 = arith.constant 0 : index
    %93 = vector.load %arg4[%c0_10, %c0_11] : memref<32x32xf32, #tpu.memory_space<vmem>>, vector<32x32xf32>
    %cst_12 = arith.constant dense<0.000000e+00> : vector<16x32xf32>
    %94 = tpu.matmul %92, %93, %cst_12 {dimension_numbers = #tpu.dot_dimension_numbers<[1], [0], [0], [1], [0, 0, 1, 1], [], []>} : vector<16x32xf32>, vector<32x32xf32>, vector<16x32xf32> -> vector<16x32xf32>
    %c0_13 = arith.constant 0 : index
    %c0_14 = arith.constant 0 : index
    %95 = vector.load %arg5[%c0_13, %c0_14] : memref<1x32xf32, #tpu.memory_space<vmem>>, vector<1x32xf32>
    %96 = vector.broadcast %95 : vector<1x32xf32> to vector<16x32xf32>
    %97 = arith.addf %94, %96 : vector<16x32xf32>
    %c0_15 = arith.constant 0 : index
    %c0_16 = arith.constant 0 : index
    %98 = vector.load %arg6[%c0_15, %c0_16] : memref<16x32xf32, #tpu.memory_space<vmem>>, vector<16x32xf32>
    tpu.vector_store %arg6[%c0_15, %c0_16], %97 {strides = array<i32>} : memref<16x32xf32, #tpu.memory_space<vmem>>, vector<16x32xf32>,
    return
  }
  func.func @transform_0(%arg0: i32) -> (i32, i32) {
    %c0_i32 = arith.constant 0 : i32
    %c0_i32_0 = arith.constant 0 : i32
    return %arg0, %c0_i32 : i32, i32
  }
  func.func @transform_1(%arg0: i32) -> (i32, i32) {
    %c0_i32 = arith.constant 0 : i32
    %c0_i32_0 = arith.constant 0 : i32
    %c0_i32_1 = arith.constant 0 : i32
    return %c0_i32, %c0_i32_0 : i32, i32
  }
  func.func @transform_2(%arg0: i32) -> (i32, i32) {
    %c0_i32 = arith.constant 0 : i32
    %c0_i32_0 = arith.constant 0 : i32
    %c0_i32_1 = arith.constant 0 : i32
    return %c0_i32, %c0_i32_0 : i32, i32
  }
  func.func @transform_3(%arg0: i32) -> (i32, i32) {
    %c0_i32 = arith.constant 0 : i32
    %c0_i32_0 = arith.constant 0 : i32
    %c0_i32_1 = arith.constant 0 : i32
    return %c0_i32, %c0_i32_0 : i32, i32
  }
  func.func @transform_4(%arg0: i32) -> (i32, i32) {
    %c0_i32 = arith.constant 0 : i32
    %c0_i32_0 = arith.constant 0 : i32
    %c0_i32_1 = arith.constant 0 : i32
    return %c0_i32, %c0_i32_0 : i32, i32
  }
  func.func @transform_5(%arg0: i32) -> (i32, i32) {
    %c0_i32 = arith.constant 0 : i32
    %c0_i32_0 = arith.constant 0 : i32
    return %arg0, %c0_i32 : i32, i32
  }
}

module attributes {stable_mosaic.version = 11 : i64} {
  func.func @_mhsa_kernel(%arg0: i32, %arg1: memref<16x32xf32, #tpu.memory_space<vmem>>, %arg2: memref<32x96xf32, #tpu.memory_space<vmem>>, %arg3: memref<1x96xf32, #tpu.memory_space<vmem>>, %arg4: memref<32x32xf32, #tpu.memory_space<vmem>>, %arg5: memref<1x32xf32, #tpu.memory_space<vmem>>, %arg6: memref<16x32xf32, #tpu.memory_space<vmem>>) attributes {dimension_semantics = [#tpu.dimension_semantics<parallel>], iteration_bounds = array<i64: 2>, scalar_prefetch = 0 : i64, scratch_operands = 0 : i64, tpu.core_type = #tpu.core_type<tc>, window_params = [{transform_indices = @transform_0, window_bounds = array<i64: 16, 32>}, {pipeline_mode = #tpu.pipeline_mode<synchronous>, transform_indices = @transform_1, window_bounds = array<i64: 32, 96>}, {pipeline_mode = #tpu.pipeline_mode<synchronous>, transform_indices = @transform_2, window_bounds = array<i64: 1, 96>}, {pipeline_mode = #tpu.pipeline_mode<synchronous>, transform_indices = @transform_3, window_bounds = array<i64: 32, 32>}, {pipeline_mode = #tpu.pipeline_mode<synchronous>, transform_indices = @transform_4, window_bounds = array<i64: 1, 32>}, {transform_indices = @transform_5, window_bounds = array<i64: 16, 32>}]} {
    %c0 = arith.constant 0 : index
    %c0_0 = arith.constant 0 : index
    %0 = vector.load %arg1[%c0, %c0_0] : memref<16x32xf32, #tpu.memory_space<vmem>>, vector<16x32xf32>
    %c0_1 = arith.constant 0 : index
    %c0_2 = arith.constant 0 : index
    %1 = vector.load %arg2[%c0_1, %c0_2] : memref<32x96xf32, #tpu.memory_space<vmem>>, vector<32x96xf32>
    %cst = arith.constant dense<0.000000e+00> : vector<16x96xf32>
    %2 = tpu.matmul %0, %1, %cst {dimension_numbers = #tpu.dot_dimension_numbers<[1], [0], [0], [1], [0, 0, 1, 1], [], []>} : vector<16x32xf32>, vector<32x96xf32>, vector<16x96xf32> -> vector<16x96xf32>
    %c0_3 = arith.constant 0 : index
    %c0_4 = arith.constant 0 : index
    %3 = vector.load %arg3[%c0_3, %c0_4] : memref<1x96xf32, #tpu.memory_space<vmem>>, vector<1x96xf32>
    %4 = vector.broadcast %3 : vector<1x96xf32> to vector<16x96xf32>
    %5 = arith.addf %2, %4 : vector<16x96xf32>
    %6 = vector.extract_strided_slice %5 {offsets = [0, 0], sizes = [16, 32], strides = [1, 1]} : vector<16x96xf32> to vector<16x32xf32>
    %cst_5 = arith.constant 0.353553385 : f32
    %7 = vector.broadcast %cst_5 : f32 to vector<16x32xf32>
    %8 = arith.mulf %6, %7 : vector<16x32xf32>
    %9 = vector.extract_strided_slice %5 {offsets = [0, 32], sizes = [16, 32], strides = [1, 1]} : vector<16x96xf32> to vector<16x32xf32>
    %10 = vector.extract_strided_slice %5 {offsets = [0, 64], sizes = [16, 32], strides = [1, 1]} : vector<16x96xf32> to vector<16x32xf32>
    %11 = vector.extract_strided_slice %8 {offsets = [0, 0], sizes = [8, 8], strides = [1, 1]} : vector<16x32xf32> to vector<8x8xf32>
    %12 = vector.extract_strided_slice %8 {offsets = [0, 8], sizes = [8, 8], strides = [1, 1]} : vector<16x32xf32> to vector<8x8xf32>
    %13 = vector.extract_strided_slice %8 {offsets = [0, 16], sizes = [8, 8], strides = [1, 1]} : vector<16x32xf32> to vector<8x8xf32>
    %14 = vector.extract_strided_slice %8 {offsets = [0, 24], sizes = [8, 8], strides = [1, 1]} : vector<16x32xf32> to vector<8x8xf32>
    %15 = vector.extract_strided_slice %8 {offsets = [8, 0], sizes = [8, 8], strides = [1, 1]} : vector<16x32xf32> to vector<8x8xf32>
    %16 = vector.extract_strided_slice %8 {offsets = [8, 8], sizes = [8, 8], strides = [1, 1]} : vector<16x32xf32> to vector<8x8xf32>
    %17 = vector.extract_strided_slice %8 {offsets = [8, 16], sizes = [8, 8], strides = [1, 1]} : vector<16x32xf32> to vector<8x8xf32>
    %18 = vector.extract_strided_slice %8 {offsets = [8, 24], sizes = [8, 8], strides = [1, 1]} : vector<16x32xf32> to vector<8x8xf32>
    %19 = vector.shape_cast %11 : vector<8x8xf32> to vector<1x8x8xf32>
    %20 = vector.shape_cast %12 : vector<8x8xf32> to vector<1x8x8xf32>
    %21 = vector.shape_cast %13 : vector<8x8xf32> to vector<1x8x8xf32>
    %22 = vector.shape_cast %14 : vector<8x8xf32> to vector<1x8x8xf32>
    %23 = vector.shape_cast %15 : vector<8x8xf32> to vector<1x8x8xf32>
    %24 = vector.shape_cast %16 : vector<8x8xf32> to vector<1x8x8xf32>
    %25 = vector.shape_cast %17 : vector<8x8xf32> to vector<1x8x8xf32>
    %26 = vector.shape_cast %18 : vector<8x8xf32> to vector<1x8x8xf32>
    %27 = tpu.concatenate %19, %20, %21, %22, %23, %24, %25, %26 in 0 : vector<1x8x8xf32>, vector<1x8x8xf32>, vector<1x8x8xf32>, vector<1x8x8xf32>, vector<1x8x8xf32>, vector<1x8x8xf32>, vector<1x8x8xf32>, vector<1x8x8xf32> -> vector<8x8x8xf32>
    %28 = vector.extract_strided_slice %9 {offsets = [0, 0], sizes = [8, 8], strides = [1, 1]} : vector<16x32xf32> to vector<8x8xf32>
    %29 = vector.extract_strided_slice %9 {offsets = [0, 8], sizes = [8, 8], strides = [1, 1]} : vector<16x32xf32> to vector<8x8xf32>
    %30 = vector.extract_strided_slice %9 {offsets = [0, 16], sizes = [8, 8], strides = [1, 1]} : vector<16x32xf32> to vector<8x8xf32>
    %31 = vector.extract_strided_slice %9 {offsets = [0, 24], sizes = [8, 8], strides = [1, 1]} : vector<16x32xf32> to vector<8x8xf32>
    %32 = vector.extract_strided_slice %9 {offsets = [8, 0], sizes = [8, 8], strides = [1, 1]} : vector<16x32xf32> to vector<8x8xf32>
    %33 = vector.extract_strided_slice %9 {offsets = [8, 8], sizes = [8, 8], strides = [1, 1]} : vector<16x32xf32> to vector<8x8xf32>
    %34 = vector.extract_strided_slice %9 {offsets = [8, 16], sizes = [8, 8], strides = [1, 1]} : vector<16x32xf32> to vector<8x8xf32>
    %35 = vector.extract_strided_slice %9 {offsets = [8, 24], sizes = [8, 8], strides = [1, 1]} : vector<16x32xf32> to vector<8x8xf32>
    %36 = vector.shape_cast %28 : vector<8x8xf32> to vector<1x8x8xf32>
    %37 = vector.shape_cast %29 : vector<8x8xf32> to vector<1x8x8xf32>
    %38 = vector.shape_cast %30 : vector<8x8xf32> to vector<1x8x8xf32>
    %39 = vector.shape_cast %31 : vector<8x8xf32> to vector<1x8x8xf32>
    %40 = vector.shape_cast %32 : vector<8x8xf32> to vector<1x8x8xf32>
    %41 = vector.shape_cast %33 : vector<8x8xf32> to vector<1x8x8xf32>
    %42 = vector.shape_cast %34 : vector<8x8xf32> to vector<1x8x8xf32>
    %43 = vector.shape_cast %35 : vector<8x8xf32> to vector<1x8x8xf32>
    %44 = tpu.concatenate %36, %37, %38, %39, %40, %41, %42, %43 in 0 : vector<1x8x8xf32>, vector<1x8x8xf32>, vector<1x8x8xf32>, vector<1x8x8xf32>, vector<1x8x8xf32>, vector<1x8x8xf32>, vector<1x8x8xf32>, vector<1x8x8xf32> -> vector<8x8x8xf32>
    %45 = vector.extract_strided_slice %10 {offsets = [0, 0], sizes = [8, 8], strides = [1, 1]} : vector<16x32xf32> to vector<8x8xf32>
    %46 = vector.extract_strided_slice %10 {offsets = [0, 8], sizes = [8, 8], strides = [1, 1]} : vector<16x32xf32> to vector<8x8xf32>
    %47 = vector.extract_strided_slice %10 {offsets = [0, 16], sizes = [8, 8], strides = [1, 1]} : vector<16x32xf32> to vector<8x8xf32>
    %48 = vector.extract_strided_slice %10 {offsets = [0, 24], sizes = [8, 8], strides = [1, 1]} : vector<16x32xf32> to vector<8x8xf32>
    %49 = vector.extract_strided_slice %10 {offsets = [8, 0], sizes = [8, 8], strides = [1, 1]} : vector<16x32xf32> to vector<8x8xf32>
    %50 = vector.extract_strided_slice %10 {offsets = [8, 8], sizes = [8, 8], strides = [1, 1]} : vector<16x32xf32> to vector<8x8xf32>
    %51 = vector.extract_strided_slice %10 {offsets = [8, 16], sizes = [8, 8], strides = [1, 1]} : vector<16x32xf32> to vector<8x8xf32>
    %52 = vector.extract_strided_slice %10 {offsets = [8, 24], sizes = [8, 8], strides = [1, 1]} : vector<16x32xf32> to vector<8x8xf32>
    %53 = vector.shape_cast %45 : vector<8x8xf32> to vector<1x8x8xf32>
    %54 = vector.shape_cast %46 : vector<8x8xf32> to vector<1x8x8xf32>
    %55 = vector.shape_cast %47 : vector<8x8xf32> to vector<1x8x8xf32>
    %56 = vector.shape_cast %48 : vector<8x8xf32> to vector<1x8x8xf32>
    %57 = vector.shape_cast %49 : vector<8x8xf32> to vector<1x8x8xf32>
    %58 = vector.shape_cast %50 : vector<8x8xf32> to vector<1x8x8xf32>
    %59 = vector.shape_cast %51 : vector<8x8xf32> to vector<1x8x8xf32>
    %60 = vector.shape_cast %52 : vector<8x8xf32> to vector<1x8x8xf32>
    %61 = tpu.concatenate %53, %54, %55, %56, %57, %58, %59, %60 in 0 : vector<1x8x8xf32>, vector<1x8x8xf32>, vector<1x8x8xf32>, vector<1x8x8xf32>, vector<1x8x8xf32>, vector<1x8x8xf32>, vector<1x8x8xf32>, vector<1x8x8xf32> -> vector<8x8x8xf32>
    "tpu.trace_start"() <{level = 10 : i32, message = "zqd,zkd->zqk"}> : () -> ()
    %cst_6 = arith.constant dense<0.000000e+00> : vector<8x8x8xf32>
    %62 = tpu.matmul %27, %44, %cst_6 {dimension_numbers = #tpu.dot_dimension_numbers<[2], [2], [1], [1], [0, 0, 0, 1, 1, 1], [0], [0]>} : vector<8x8x8xf32>, vector<8x8x8xf32>, vector<8x8x8xf32> -> vector<8x8x8xf32>
    "tpu.trace_stop"() : () -> ()
    %cst_7 = arith.constant dense<0xFF800000> : vector<8x8xf32>
    %63 = vector.multi_reduction <maximumf>, %62, %cst_7 [2] : vector<8x8x8xf32> to vector<8x8xf32>
    %64 = vector.shape_cast %63 : vector<8x8xf32> to vector<8x8x1xf32>
    %65 = vector.broadcast %64 : vector<8x8x1xf32> to vector<8x8x8xf32>
    %66 = arith.subf %62, %65 : vector<8x8x8xf32>
    %67 = math.exp %66 : vector<8x8x8xf32>
    %cst_8 = arith.constant dense<0.000000e+00> : vector<8x8xf32>
    %68 = vector.multi_reduction <add>, %67, %cst_8 [2] : vector<8x8x8xf32> to vector<8x8xf32>
    %69 = vector.shape_cast %68 : vector<8x8xf32> to vector<8x8x1xf32>
    %70 = tpu.reciprocal %69 {approx = true} : vector<8x8x1xf32> -> vector<8x8x1xf32>
    %71 = vector.broadcast %70 : vector<8x8x1xf32> to vector<8x8x8xf32>
    %72 = arith.mulf %67, %71 : vector<8x8x8xf32>
    "tpu.trace_start"() <{level = 10 : i32, message = "zqk,zkd->zqd"}> : () -> ()
    %cst_9 = arith.constant dense<0.000000e+00> : vector<8x8x8xf32>
    %73 = tpu.matmul %72, %61, %cst_9 {dimension_numbers = #tpu.dot_dimension_numbers<[2], [1], [1], [2], [0, 0, 0, 1, 1, 2], [0], [0]>} : vector<8x8x8xf32>, vector<8x8x8xf32>, vector<8x8x8xf32> -> vector<8x8x8xf32>
    "tpu.trace_stop"() : () -> ()
    %74 = vector.extract_strided_slice %73 {offsets = [0, 0, 0], sizes = [1, 8, 8], strides = [1, 1, 1]} : vector<8x8x8xf32> to vector<1x8x8xf32>
    %75 = vector.shape_cast %74 : vector<1x8x8xf32> to vector<8x8xf32>
    %76 = vector.extract_strided_slice %73 {offsets = [1, 0, 0], sizes = [1, 8, 8], strides = [1, 1, 1]} : vector<8x8x8xf32> to vector<1x8x8xf32>
    %77 = vector.shape_cast %76 : vector<1x8x8xf32> to vector<8x8xf32>
    %78 = vector.extract_strided_slice %73 {offsets = [2, 0, 0], sizes = [1, 8, 8], strides = [1, 1, 1]} : vector<8x8x8xf32> to vector<1x8x8xf32>
    %79 = vector.shape_cast %78 : vector<1x8x8xf32> to vector<8x8xf32>
    %80 = vector.extract_strided_slice %73 {offsets = [3, 0, 0], sizes = [1, 8, 8], strides = [1, 1, 1]} : vector<8x8x8xf32> to vector<1x8x8xf32>
    %81 = vector.shape_cast %80 : vector<1x8x8xf32> to vector<8x8xf32>
    %82 = tpu.concatenate %75, %77, %79, %81 in 1 : vector<8x8xf32>, vector<8x8xf32>, vector<8x8xf32>, vector<8x8xf32> -> vector<8x32xf32>
    %83 = vector.extract_strided_slice %73 {offsets = [4, 0, 0], sizes = [1, 8, 8], strides = [1, 1, 1]} : vector<8x8x8xf32> to vector<1x8x8xf32>
    %84 = vector.shape_cast %83 : vector<1x8x8xf32> to vector<8x8xf32>
    %85 = vector.extract_strided_slice %73 {offsets = [5, 0, 0], sizes = [1, 8, 8], strides = [1, 1, 1]} : vector<8x8x8xf32> to vector<1x8x8xf32>
    %86 = vector.shape_cast %85 : vector<1x8x8xf32> to vector<8x8xf32>
    %87 = vector.extract_strided_slice %73 {offsets = [6, 0, 0], sizes = [1, 8, 8], strides = [1, 1, 1]} : vector<8x8x8xf32> to vector<1x8x8xf32>
    %88 = vector.shape_cast %87 : vector<1x8x8xf32> to vector<8x8xf32>
    %89 = vector.extract_strided_slice %73 {offsets = [7, 0, 0], sizes = [1, 8, 8], strides = [1, 1, 1]} : vector<8x8x8xf32> to vector<1x8x8xf32>
    %90 = vector.shape_cast %89 : vector<1x8x8xf32> to vector<8x8xf32>
    %91 = tpu.concatenate %84, %86, %88, %90 in 1 : vector<8x8xf32>, vector<8x8xf32>, vector<8x8xf32>, vector<8x8xf32> -> vector<8x32xf32>
    %92 = tpu.concatenate %82, %91 in 0 : vector<8x32xf32>, vector<8x32xf32> -> vector<16x32xf32>
    %c0_10 = arith.constant 0 : index
    %c0_11 = arith.constant 0 : index
    %93 = vector.load %arg4[%c0_10, %c0_11] : memref<32x32xf32, #tpu.memory_space<vmem>>, vector<32x32xf32>
    %cst_12 = arith.constant dense<0.000000e+00> : vector<16x32xf32>
    %94 = tpu.matmul %92, %93, %cst_12 {dimension_numbers = #tpu.dot_dimension_numbers<[1], [0], [0], [1], [0, 0, 1, 1], [], []>} : vector<16x32xf32>, vector<32x32xf32>, vector<16x32xf32> -> vector<16x32xf32>
    %c0_13 = arith.constant 0 : index
    %c0_14 = arith.constant 0 : index
    %95 = vector.load %arg5[%c0_13, %c0_14] : memref<1x32xf32, #tpu.memory_space<vmem>>, vector<1x32xf32>
    %96 = vector.broadcast %95 : vector<1x32xf32> to vector<16x32xf32>
    %97 = arith.addf %94, %96 : vector<16x32xf32>
    %c0_15 = arith.constant 0 : index
    %c0_16 = arith.constant 0 : index
    %98 = vector.load %arg6[%c0_15, %c0_16] : memref<16x32xf32, #tpu.memory_space<vmem>>, vector<16x32xf32>
    tpu.vector_store %arg6[%c0_15, %c0_16], %97 {strides = array<i32>} : memref<16x32xf32, #tpu.memory_space<vmem>>, vector<16x32xf32>,
    return
  }
  func.func @transform_0(%arg0: i32) -> (i32, i32) {
    %c0_i32 = arith.constant 0 : i32
    %c0_i32_0 = arith.constant 0 : i32
    return %arg0, %c0_i32 : i32, i32
  }
  func.func @transform_1(%arg0: i32) -> (i32, i32) {
    %c0_i32 = arith.constant 0 : i32
    %c0_i32_0 = arith.constant 0 : i32
    %c0_i32_1 = arith.constant 0 : i32
    return %c0_i32, %c0_i32_0 : i32, i32
  }
  func.func @transform_2(%arg0: i32) -> (i32, i32) {
    %c0_i32 = arith.constant 0 : i32
    %c0_i32_0 = arith.constant 0 : i32
    %c0_i32_1 = arith.constant 0 : i32
    return %c0_i32, %c0_i32_0 : i32, i32
  }
  func.func @transform_3(%arg0: i32) -> (i32, i32) {
    %c0_i32 = arith.constant 0 : i32
    %c0_i32_0 = arith.constant 0 : i32
    %c0_i32_1 = arith.constant 0 : i32
    return %c0_i32, %c0_i32_0 : i32, i32
  }
  func.func @transform_4(%arg0: i32) -> (i32, i32) {
    %c0_i32 = arith.constant 0 : i32
    %c0_i32_0 = arith.constant 0 : i32
    %c0_i32_1 = arith.constant 0 : i32
    return %c0_i32, %c0_i32_0 : i32, i32
  }
  func.func @transform_5(%arg0: i32) -> (i32, i32) {
    %c0_i32 = arith.constant 0 : i32
    %c0_i32_0 = arith.constant 0 : i32
    return %arg0, %c0_i32 : i32, i32
  }
}

</mosaic_0001>

<llo_original>
// kernel: tpu_custom_call.1
$region0: #{tpu_custom_call.1}
  #allocation0 [shape = 'u32[]', space=smem, size = 0x4, offset = 0x4, fixed_abs, tag = 'smem constant byte address 0x4 - core index']
  #allocation1 [shape = 'u32[72,128]{1,0:T(1,128)}', space=vmem, size = 0x9000, scoped, tag = 'internal scratch']
  %s0 = inlined_call_operand.hbm [shape: f32[32,32], index: 0, kind: input, shape index: {}]
  %s1 = inlined_call_operand.hbm [shape: f32[32,96], index: 1, kind: input, shape index: {}]
  %s2 = inlined_call_operand.vmem [shape: f32[1,96], index: 2, kind: input, shape index: {}]
  %s3 = inlined_call_operand.hbm [shape: f32[32,32], index: 3, kind: input, shape index: {}]
  %s4 = inlined_call_operand.vmem [shape: f32[1,32], index: 4, kind: input, shape index: {}]
  %s5 = inlined_call_operand.hbm [shape: f32[32,32], index: 5, kind: output, shape index: {}]
  %s6 = sld [smem:[#allocation0]]
  $region65: #{tpu_custom_call.1} parent=0
    _
  %s8 = ssub.s32 1, %s6
  %s9 = scalar_select 0, %s8, %s6
  $region1: #{tpu_custom_call.1} parent=0
    #allocation2 [shape = 'u8[16384]{0}', space=vmem, size = 0x4000, scoped, tag = 'input window, operand 0']
    #allocation3 [shape = 's32[2]{0}', space=sflag, size = 0x8, scoped, tag = 'scoped memory for tpu_custom_call.1']
    #allocation4 [shape = 's32[2]{0}', space=sflag, size = 0x8, scoped, tag = 'scoped memory for tpu_custom_call.1']
    #allocation5 [shape = 'u8[16384]{0}', space=vmem, size = 0x4000, scoped, tag = 'input window, operand 1, single buffered']
    #allocation6 [shape = 's32[1]{0}', space=sflag, size = 0x4, scoped, tag = 'scoped memory for tpu_custom_call.1']
    #allocation7 [shape = 'u8[16384]{0}', space=vmem, size = 0x4000, scoped, tag = 'input window, operand 3, single buffered']
    #allocation8 [shape = 'u8[16384]{0}', space=vmem, size = 0x4000, scoped, tag = 'output window, operand 0']
    %10 = vsyncpa [#allocation3], 0
    %s11 = scalar_lea.sflag [#allocation3], 1
    %12 = vsyncpa %s11, 0
    %13 = vsyncpa [#allocation6], 0
    %14 = vsyncpa [#allocation4], 0
    %s15 = scalar_lea.sflag [#allocation4], 1
    %16 = vsyncpa %s15, 0
    loop: start=0, step=1, limit=4
    $region2: #{tpu_custom_call.1} parent=1 // loop_pre_header
      _
    $region3: #{tpu_custom_call.1} parent=1 // loop_header
      %s18 = sphi 0, %s22
      %p19 = scmp.ge.s32.totalorder %s18, 4
      %s28 = sphi 0, %s30
      %s31 = sphi 0, %s28
      %s32 = sphi 0, %s31
      %s48 = sphi 0, %s32
      %s52 = sphi 0, %s52
      %s54 = sphi 0, %s52
      %s55 = sphi 0, %s54
      %s69 = sphi 0, %s55
      %s73 = sphi 0, %s73
      %s75 = sphi 0, %s73
      %s76 = sphi 0, %s75
      %s90 = sphi 0, %s76
      %s94 = sphi 0, %s94
      %s96 = sphi 0, %s94
      %s97 = sphi 0, %s96
      %s111 = sphi 0, %s97
      %s115 = sphi 0, %s115
      %s117 = sphi 0, %s115
      %s118 = sphi 0, %s117
      %s132 = sphi 0, %s118
      %s138 = sphi 0, %s140
      %s141 = sphi 0, %s138
      %s142 = sphi 0, %s141
      %s158 = sphi 0, %s142
    $region4: #{tpu_custom_call.1} parent=1 // loop_header_branch
      %21 = sbr.rel (%p19) target = $region8
    $region5: #{tpu_custom_call.1} parent=1 // loop_body
      %s23 = ssub.s32 %s18, 1
      %s24 = ssub.s32 %s18, 2
      %s25 = sadd.s32 %s18, 1
      %s26 = ssub.s32 %s18, %s25
      %p27 = scmp.eq.s32.totalorder %s26, 0
      %s29 = sadd.s32 %s28, 1
      %s30 = scalar_select %p27, %s28, %s29
      %p33 = pneg %p27
      %p34 = scmp.eq.s32.totalorder %s18, 1
      %p35 = por %p33, %p34
      %p36 = scmp.ne.s32.totalorder %s28, %s31
      %p37 = scmp.eq.s32.totalorder %s18, 0
      %p38 = por %p36, %p37
      %p39 = scmp.ne.s32.totalorder %s28, %s31
      %p40 = scmp.eq.s32.totalorder %s23, 1
      %p41 = por %p39, %p40
      %p42 = scmp.ne.s32.totalorder %s31, %s32
      %p43 = scmp.eq.s32.totalorder %s23, 0
      %p44 = por %p42, %p43
      %p45 = scmp.ne.s32.totalorder %s31, %s32
      %p46 = scmp.eq.s32.totalorder %s24, 1
      %p47 = por %p45, %p46
      %p49 = scmp.ne.s32.totalorder %s32, %s48
      %p50 = scmp.eq.s32.totalorder %s24, 0
      %p51 = por %p49, %p50
      %s53 = sadd.s32 %s52, 1
      %p56 = scmp.eq.s32.totalorder %s18, 1
      %p57 = scmp.ne.s32.totalorder %s52, %s54
      %p58 = scmp.eq.s32.totalorder %s18, 0
      %p59 = por %p57, %p58
      %p60 = scmp.ne.s32.totalorder %s52, %s54
      %p61 = scmp.eq.s32.totalorder %s23, 1
      %p62 = por %p60, %p61
      %p63 = scmp.ne.s32.totalorder %s54, %s55
      %p64 = scmp.eq.s32.totalorder %s23, 0
      %p65 = por %p63, %p64
      %p66 = scmp.ne.s32.totalorder %s54, %s55
      %p67 = scmp.eq.s32.totalorder %s24, 1
      %p68 = por %p66, %p67
      %p70 = scmp.ne.s32.totalorder %s55, %s69
      %p71 = scmp.eq.s32.totalorder %s24, 0
      %p72 = por %p70, %p71
      %s74 = sadd.s32 %s73, 1
      %p77 = scmp.eq.s32.totalorder %s18, 1
      %p78 = scmp.ne.s32.totalorder %s73, %s75
      %p79 = scmp.eq.s32.totalorder %s18, 0
      %p80 = por %p78, %p79
      %p81 = scmp.ne.s32.totalorder %s73, %s75
      %p82 = scmp.eq.s32.totalorder %s23, 1
      %p83 = por %p81, %p82
      %p84 = scmp.ne.s32.totalorder %s75, %s76
      %p85 = scmp.eq.s32.totalorder %s23, 0
      %p86 = por %p84, %p85
      %p87 = scmp.ne.s32.totalorder %s75, %s76
      %p88 = scmp.eq.s32.totalorder %s24, 1
      %p89 = por %p87, %p88
      %p91 = scmp.ne.s32.totalorder %s76, %s90
      %p92 = scmp.eq.s32.totalorder %s24, 0
      %p93 = por %p91, %p92
      %s95 = sadd.s32 %s94, 1
      %p98 = scmp.eq.s32.totalorder %s18, 1
      %p99 = scmp.ne.s32.totalorder %s94, %s96
      %p100 = scmp.eq.s32.totalorder %s18, 0
      %p101 = por %p99, %p100
      %p102 = scmp.ne.s32.totalorder %s94, %s96
      %p103 = scmp.eq.s32.totalorder %s23, 1
      %p104 = por %p102, %p103
      %p105 = scmp.ne.s32.totalorder %s96, %s97
      %p106 = scmp.eq.s32.totalorder %s23, 0
      %p107 = por %p105, %p106
      %p108 = scmp.ne.s32.totalorder %s96, %s97
      %p109 = scmp.eq.s32.totalorder %s24, 1
      %p110 = por %p108, %p109
      %p112 = scmp.ne.s32.totalorder %s97, %s111
      %p113 = scmp.eq.s32.totalorder %s24, 0
      %p114 = por %p112, %p113
      %s116 = sadd.s32 %s115, 1
      %p119 = scmp.eq.s32.totalorder %s18, 1
      %p120 = scmp.ne.s32.totalorder %s115, %s117
      %p121 = scmp.eq.s32.totalorder %s18, 0
      %p122 = por %p120, %p121
      %p123 = scmp.ne.s32.totalorder %s115, %s117
      %p124 = scmp.eq.s32.totalorder %s23, 1
      %p125 = por %p123, %p124
      %p126 = scmp.ne.s32.totalorder %s117, %s118
      %p127 = scmp.eq.s32.totalorder %s23, 0
      %p128 = por %p126, %p127
      %p129 = scmp.ne.s32.totalorder %s117, %s118
      %p130 = scmp.eq.s32.totalorder %s24, 1
      %p131 = por %p129, %p130
      %p133 = scmp.ne.s32.totalorder %s118, %s132
      %p134 = scmp.eq.s32.totalorder %s24, 0
      %p135 = por %p133, %p134
      %s136 = ssub.s32 %s18, %s25
      %p137 = scmp.eq.s32.totalorder %s136, 0
      %s139 = sadd.s32 %s138, 1
      %s140 = scalar_select %p137, %s138, %s139
      %p143 = pneg %p137
      %p144 = scmp.eq.s32.totalorder %s18, 1
      %p145 = por %p143, %p144
      %p146 = scmp.ne.s32.totalorder %s138, %s141
      %p147 = scmp.eq.s32.totalorder %s18, 0
      %p148 = por %p146, %p147
      %p149 = scmp.ne.s32.totalorder %s138, %s141
      %p150 = scmp.eq.s32.totalorder %s23, 1
      %p151 = por %p149, %p150
      %p152 = scmp.ne.s32.totalorder %s141, %s142
      %p153 = scmp.eq.s32.totalorder %s23, 0
      %p154 = por %p152, %p153
      %p155 = scmp.ne.s32.totalorder %s141, %s142
      %p156 = scmp.eq.s32.totalorder %s24, 1
      %p157 = por %p155, %p156
      %p159 = scmp.ne.s32.totalorder %s142, %s158
      %p160 = scmp.eq.s32.totalorder %s24, 0
      %p161 = por %p159, %p160
      %p162 = scmp.le.s32.totalorder 1, %s18
      %p163 = scmp.lt.s32.totalorder %s18, 3
      %p164 = pnand %p162, %p163
      %p165 = pneg %p164
      // Predicated region
      $region9: #{tpu_custom_call.1} parent=5 // pred_check
        _
      $region10: #{tpu_custom_call.1} parent=5 // pred_check_branch
        %167 = sbr.rel (%p164) target = $region12
      $region11: #{tpu_custom_call.1} parent=5 // pred_region
        %s168 = ssub.s32 %s18, 1
        // Predicated region
        $region13: #{tpu_custom_call.1} parent=11 // pred_check
          %p169 = pneg %p65
        $region14: #{tpu_custom_call.1} parent=11 // pred_check_branch
          %171 = sbr.rel (%p169) target = $region16
        $region15: #{tpu_custom_call.1} parent=11 // pred_region
          %173 = vsyncadd [#allocation6], 0
          %s174 = sshll.u32 %s1, 4
          %s175 = int_to_ptr.hbm [resolvable:$true] %s174
          %s176 = sshll.u32 [#allocation5], 4
          %s177 = int_to_ptr.vmem [resolvable:$true] %s176
          %182 = dma.hbm_to_vmem [thread:$0]  %s175, 512, %s177, [#allocation6], 128, 128, 8
        $region16: #{tpu_custom_call.1} parent=11 // pred_fallthru
          _
        // Predicated region
        $region17: #{tpu_custom_call.1} parent=11 // pred_check
          %p183 = pneg %p86
        $region18: #{tpu_custom_call.1} parent=11 // pred_check_branch
          %185 = sbr.rel (%p183) target = $region20
        $region19: #{tpu_custom_call.1} parent=11 // pred_region
          _
        $region20: #{tpu_custom_call.1} parent=11 // pred_fallthru
          _
        // Predicated region
        $region21: #{tpu_custom_call.1} parent=11 // pred_check
          %p186 = pneg %p107
        $region22: #{tpu_custom_call.1} parent=11 // pred_check_branch
          %188 = sbr.rel (%p186) target = $region24
        $region23: #{tpu_custom_call.1} parent=11 // pred_region
          %190 = vsyncadd [#allocation6], 0
          %s191 = sshll.u32 %s3, 4
          %s192 = int_to_ptr.hbm [resolvable:$true] %s191
          %s193 = sshll.u32 [#allocation7], 4
          %s194 = int_to_ptr.vmem [resolvable:$true] %s193
          %199 = dma.hbm_to_vmem [thread:$0]  %s192, 512, %s194, [#allocation6], 128, 128, 8
        $region24: #{tpu_custom_call.1} parent=11 // pred_fallthru
          _
        // Predicated region
        $region25: #{tpu_custom_call.1} parent=11 // pred_check
          %p200 = pneg %p128
        $region26: #{tpu_custom_call.1} parent=11 // pred_check_branch
          %202 = sbr.rel (%p200) target = $region28
        $region27: #{tpu_custom_call.1} parent=11 // pred_region
          _
        $region28: #{tpu_custom_call.1} parent=11 // pred_fallthru
          _
      $region12: #{tpu_custom_call.1} parent=5 // pred_fallthru
        _
      %p203 = scmp.lt.s32.totalorder %s18, 2
      // Predicated region
      $region29: #{tpu_custom_call.1} parent=5 // pred_check
        %p204 = pneg %p203
      $region30: #{tpu_custom_call.1} parent=5 // pred_check_branch
        %206 = sbr.rel (%p204) target = $region32
      $region31: #{tpu_custom_call.1} parent=5 // pred_region
        // Predicated region
        $region33: #{tpu_custom_call.1} parent=31 // pred_check
          %p207 = pneg %p38
        $region34: #{tpu_custom_call.1} parent=31 // pred_check_branch
          %209 = sbr.rel (%p207) target = $region36
        $region35: #{tpu_custom_call.1} parent=31 // pred_region
          %s210 = sand.u32 %s28, 1
          %s211 = scalar_lea.sflag [#allocation3], %s210
          %s212 = sand.u32 %s28, 1
          %s213 = smul.addr %s212, 16
          %s214 = scalar_lea.vmem [#allocation2], %s213
          %s215 = smul.u32 2, %s18
          %217 = vsyncadd %s211, 0
          %s218 = smul.addr %s215, 8
          %s219 = scalar_lea.hbm %s0, %s218
          %s220 = sshll.u32 %s219, 4
          %s221 = int_to_ptr.hbm [resolvable:$true] %s220
          %s222 = sshll.u32 %s214, 4
          %s223 = int_to_ptr.vmem [resolvable:$true] %s222
          %228 = dma.hbm_to_vmem [thread:$0]  %s221, 256, %s223, %s211, 128, 128, 8
        $region36: #{tpu_custom_call.1} parent=31 // pred_fallthru
          _
      $region32: #{tpu_custom_call.1} parent=5 // pred_fallthru
        _
      %p229 = scmp.le.s32.totalorder 1, %s18
      %p230 = scmp.lt.s32.totalorder %s18, 3
      %p231 = pnand %p229, %p230
      %p232 = pneg %p231
      // Predicated region
      $region37: #{tpu_custom_call.1} parent=5 // pred_check
        _
      $region38: #{tpu_custom_call.1} parent=5 // pred_check_branch
        %234 = sbr.rel (%p231) target = $region40
      $region39: #{tpu_custom_call.1} parent=5 // pred_region
        %s235 = ssub.s32 %s18, 1
        %s236 = sand.u32 %s31, 1
        %s237 = scalar_lea.sflag [#allocation3], %s236
        %s238 = sand.u32 %s31, 1
        %s239 = smul.addr %s238, 16
        %s240 = scalar_lea.vmem [#allocation2], %s239
        // Predicated region
        $region41: #{tpu_custom_call.1} parent=39 // pred_check
          %p241 = pneg %p44
        $region42: #{tpu_custom_call.1} parent=39 // pred_check_branch
          %243 = sbr.rel (%p241) target = $region44
        $region43: #{tpu_custom_call.1} parent=39 // pred_region
          %245 = dma.done %s237, 256
        $region44: #{tpu_custom_call.1} parent=39 // pred_fallthru
          _
        // Predicated region
        $region45: #{tpu_custom_call.1} parent=39 // pred_check
          %p246 = pneg %p65
        $region46: #{tpu_custom_call.1} parent=39 // pred_check_branch
          %248 = sbr.rel (%p246) target = $region48
        $region47: #{tpu_custom_call.1} parent=39 // pred_region
          %250 = dma.done [#allocation6], 512
        $region48: #{tpu_custom_call.1} parent=39 // pred_fallthru
          _
        // Predicated region
        $region49: #{tpu_custom_call.1} parent=39 // pred_check
          %p251 = pneg %p107
        $region50: #{tpu_custom_call.1} parent=39 // pred_check_branch
          %253 = sbr.rel (%p251) target = $region52
        $region51: #{tpu_custom_call.1} parent=39 // pred_region
          %255 = dma.done [#allocation6], 512
        $region52: #{tpu_custom_call.1} parent=39 // pred_fallthru
          _
        %s256 = sand.u32 %s31, 1
        %s257 = scalar_lea.sflag [#allocation3], %s256
        %s258 = sand.u32 %s31, 1
        %s259 = smul.addr %s258, 16
        %s260 = scalar_lea.vmem [#allocation2], %s259
        %p261 = pneg %p44
        %p262 = pneg %p41
        %p263 = pneg %p65
        %p264 = pneg %p62
        %p265 = pneg %p86
        %p266 = pneg %p83
        %p267 = pneg %p107
        %p268 = pneg %p104
        %p269 = pneg %p128
        %p270 = pneg %p125
        %p271 = pneg %p154
        %p272 = pneg %p151
        %s273 = sand.u32 %s141, 1
        %s274 = scalar_lea.sflag [#allocation4], %s273
        %s275 = sand.u32 %s141, 1
        %s276 = smul.addr %s275, 16
        %s277 = scalar_lea.vmem [#allocation8], %s276
        %s278 = smul.u32 2, %s23
        %s279 = smul.u32 2, %s23
        %v280 = vld [vmem:[%s240] sm:$0xff]
        %v281 = vld [vmem:[%s240 + $0x8] sm:$0xff]
        %v282 = vld [vmem:[#allocation5] sm:$0xff]
        %v283 = vld [vmem:[#allocation5 + $0x8] sm:$0xff]
        %v284 = vld [vmem:[#allocation5 + $0x10] sm:$0xff]
        %v285 = vld [vmem:[#allocation5 + $0x18] sm:$0xff]
        %v286 = vld [vmem:[%s2] sm:$0x1]
        %v288 = vperm.slane %v286, 0
        %vm290 = vcmask 261120
        %v292 = vsel %vm290, %v280, 0
        %v295 = vsel %vm290, %v281, 0
        %297 = vmatpush.msra.mxu0 0.0
        %298 = vmatpush.msra.mxu0 0.0
        %299 = vmatpush.msra.mxu0 0.0
        %300 = vmatpush.msra.mxu0 0.0
        %301 = vmatpush.msra.mxu0 0.0
        %302 = vmatpush.msra.mxu0 0.0
        %303 = vmatpush.msra.mxu0 0.0
        %304 = vmatpush.msra.mxu0 0.0
        %305 = vmatpush.msra.mxu0 0.0
        %306 = vmatpush.msra.mxu0 0.0
        %307 = vmatpush.msra.mxu0 0.0
        %308 = vmatpush.msra.mxu0 0.0
        %309 = vmatpush.msra.mxu0 %v285
        %310 = vmatpush.msra.mxu0 %v284
        %311 = vmatpush.msra.mxu0 %v283
        %312 = vmatpush.msra.mxu0 %v282
        %313 = vmatmul.f32.gmra.mxu0 %v292
        %v314 = vpop.f32.mrf.mxu0
        %v315 = vadd.f32 %v288, %v314
        %316 = vmatmul.f32.gmra.mxu0 %v295
        %v317 = vpop.f32.mrf.mxu0
        %v318 = vadd.f32 %v288, %v317
        %319 = vdwg.mxu0
        %v320 = vmul.f32 %v315, 0.35355338
        %v321 = vmul.f32 %v318, 0.35355338
        %323 = vrot.lane.b32.xlu0 %v320, 120
        %v324 = vpop.permute.xlu0 %323
        %325 = vrot.lane.b32.xlu0 %v320, 112
        %v326 = vpop.permute.xlu0 %325
        %327 = vrot.lane.b32.xlu0 %v320, 104
        %v328 = vpop.permute.xlu0 %327
        %330 = vrot.lane.b32.xlu0 %v321, 120
        %v331 = vpop.permute.xlu0 %330
        %332 = vrot.lane.b32.xlu0 %v321, 112
        %v333 = vpop.permute.xlu0 %332
        %334 = vrot.lane.b32.xlu0 %v321, 104
        %v335 = vpop.permute.xlu0 %334
        %337 = vrot.lane.b32.xlu0 %v315, 120
        %v338 = vpop.permute.xlu0 %337
        %339 = vrot.lane.b32.xlu0 %v315, 112
        %v340 = vpop.permute.xlu0 %339
        %341 = vrot.lane.b32.xlu0 %v315, 104
        %v342 = vpop.permute.xlu0 %341
        %344 = vrot.lane.b32.xlu0 %v318, 120
        %v345 = vpop.permute.xlu0 %344
        %346 = vrot.lane.b32.xlu0 %v318, 112
        %v347 = vpop.permute.xlu0 %346
        %348 = vrot.lane.b32.xlu0 %v318, 104
        %v349 = vpop.permute.xlu0 %348
        %350 = vrot.lane.b32.xlu0 %v315, 96
        %v351 = vpop.permute.xlu0 %350
        %vm352 = vcmask 64512
        %v353 = vsel %vm352, %v320, 0
        %v355 = vsel %vm352, %v351, 0
        %357 = vmatpush.xpose.msra.mxu0 0.0
        %358 = vmatpush.xpose.msra.mxu0 0.0
        %359 = vmatpush.xpose.msra.mxu0 0.0
        %360 = vmatpush.xpose.msra.mxu0 0.0
        %361 = vmatpush.xpose.msra.mxu0 0.0
        %362 = vmatpush.xpose.msra.mxu0 0.0
        %363 = vmatpush.xpose.msra.mxu0 0.0
        %364 = vmatpush.xpose.msra.mxu0 0.0
        %365 = vmatpush.xpose.msra.mxu0 0.0
        %366 = vmatpush.xpose.msra.mxu0 0.0
        %367 = vmatpush.xpose.msra.mxu0 0.0
        %368 = vmatpush.xpose.msra.mxu0 0.0
        %369 = vmatpush.xpose.msra.mxu0 0.0
        %370 = vmatpush.xpose.msra.mxu0 0.0
        %371 = vmatpush.xpose.msra.mxu0 0.0
        %372 = vmatpush.xpose.msra.mxu0 %v355
        %373 = vmatmul.f32.gmra.mxu0 %v353
        %v374 = vpop.f32.mrf.mxu0
        %v375 = vadd.f32 0.0, %v374
        %376 = vdwg.mxu0
        %377 = vrot.lane.b32.xlu0 %v338, 96
        %v378 = vpop.permute.xlu0 %377
        %v379 = vsel %vm352, %v324, 0
        %v381 = vsel %vm352, %v378, 0
        %383 = vmatpush.xpose.msra.mxu0 0.0
        %384 = vmatpush.xpose.msra.mxu0 0.0
        %385 = vmatpush.xpose.msra.mxu0 0.0
        %386 = vmatpush.xpose.msra.mxu0 0.0
        %387 = vmatpush.xpose.msra.mxu0 0.0
        %388 = vmatpush.xpose.msra.mxu0 0.0
        %389 = vmatpush.xpose.msra.mxu0 0.0
        %390 = vmatpush.xpose.msra.mxu0 0.0
        %391 = vmatpush.xpose.msra.mxu0 0.0
        %392 = vmatpush.xpose.msra.mxu0 0.0
        %393 = vmatpush.xpose.msra.mxu0 0.0
        %394 = vmatpush.xpose.msra.mxu0 0.0
        %395 = vmatpush.xpose.msra.mxu0 0.0
        %396 = vmatpush.xpose.msra.mxu0 0.0
        %397 = vmatpush.xpose.msra.mxu0 0.0
        %398 = vmatpush.xpose.msra.mxu0 %v381
        %399 = vmatmul.f32.gmra.mxu0 %v379
        %v400 = vpop.f32.mrf.mxu0
        %v401 = vadd.f32 0.0, %v400
        %402 = vdwg.mxu0
        %403 = vrot.lane.b32.xlu0 %v340, 96
        %v404 = vpop.permute.xlu0 %403
        %v405 = vsel %vm352, %v326, 0
        %v407 = vsel %vm352, %v404, 0
        %409 = vmatpush.xpose.msra.mxu0 0.0
        %410 = vmatpush.xpose.msra.mxu0 0.0
        %411 = vmatpush.xpose.msra.mxu0 0.0
        %412 = vmatpush.xpose.msra.mxu0 0.0
        %413 = vmatpush.xpose.msra.mxu0 0.0
        %414 = vmatpush.xpose.msra.mxu0 0.0
        %415 = vmatpush.xpose.msra.mxu0 0.0
        %416 = vmatpush.xpose.msra.mxu0 0.0
        %417 = vmatpush.xpose.msra.mxu0 0.0
        %418 = vmatpush.xpose.msra.mxu0 0.0
        %419 = vmatpush.xpose.msra.mxu0 0.0
        %420 = vmatpush.xpose.msra.mxu0 0.0
        %421 = vmatpush.xpose.msra.mxu0 0.0
        %422 = vmatpush.xpose.msra.mxu0 0.0
        %423 = vmatpush.xpose.msra.mxu0 0.0
        %424 = vmatpush.xpose.msra.mxu0 %v407
        %425 = vmatmul.f32.gmra.mxu0 %v405
        %v426 = vpop.f32.mrf.mxu0
        %v427 = vadd.f32 0.0, %v426
        %428 = vdwg.mxu0
        %429 = vrot.lane.b32.xlu0 %v342, 96
        %v430 = vpop.permute.xlu0 %429
        %v431 = vsel %vm352, %v328, 0
        %v433 = vsel %vm352, %v430, 0
        %435 = vmatpush.xpose.msra.mxu0 0.0
        %436 = vmatpush.xpose.msra.mxu0 0.0
        %437 = vmatpush.xpose.msra.mxu0 0.0
        %438 = vmatpush.xpose.msra.mxu0 0.0
        %439 = vmatpush.xpose.msra.mxu0 0.0
        %440 = vmatpush.xpose.msra.mxu0 0.0
        %441 = vmatpush.xpose.msra.mxu0 0.0
        %442 = vmatpush.xpose.msra.mxu0 0.0
        %443 = vmatpush.xpose.msra.mxu0 0.0
        %444 = vmatpush.xpose.msra.mxu0 0.0
        %445 = vmatpush.xpose.msra.mxu0 0.0
        %446 = vmatpush.xpose.msra.mxu0 0.0
        %447 = vmatpush.xpose.msra.mxu0 0.0
        %448 = vmatpush.xpose.msra.mxu0 0.0
        %449 = vmatpush.xpose.msra.mxu0 0.0
        %450 = vmatpush.xpose.msra.mxu0 %v433
        %451 = vmatmul.f32.gmra.mxu0 %v431
        %v452 = vpop.f32.mrf.mxu0
        %v453 = vadd.f32 0.0, %v452
        %454 = vdwg.mxu0
        %455 = vrot.lane.b32.xlu0 %v318, 96
        %v456 = vpop.permute.xlu0 %455
        %v457 = vsel %vm352, %v321, 0
        %v459 = vsel %vm352, %v456, 0
        %461 = vmatpush.xpose.msra.mxu0 0.0
        %462 = vmatpush.xpose.msra.mxu0 0.0
        %463 = vmatpush.xpose.msra.mxu0 0.0
        %464 = vmatpush.xpose.msra.mxu0 0.0
        %465 = vmatpush.xpose.msra.mxu0 0.0
        %466 = vmatpush.xpose.msra.mxu0 0.0
        %467 = vmatpush.xpose.msra.mxu0 0.0
        %468 = vmatpush.xpose.msra.mxu0 0.0
        %469 = vmatpush.xpose.msra.mxu0 0.0
        %470 = vmatpush.xpose.msra.mxu0 0.0
        %471 = vmatpush.xpose.msra.mxu0 0.0
        %472 = vmatpush.xpose.msra.mxu0 0.0
        %473 = vmatpush.xpose.msra.mxu0 0.0
        %474 = vmatpush.xpose.msra.mxu0 0.0
        %475 = vmatpush.xpose.msra.mxu0 0.0
        %476 = vmatpush.xpose.msra.mxu0 %v459
        %477 = vmatmul.f32.gmra.mxu0 %v457
        %v478 = vpop.f32.mrf.mxu0
        %v479 = vadd.f32 0.0, %v478
        %480 = vdwg.mxu0
        %481 = vrot.lane.b32.xlu0 %v345, 96
        %v482 = vpop.permute.xlu0 %481
        %v483 = vsel %vm352, %v331, 0
        %v485 = vsel %vm352, %v482, 0
        %487 = vmatpush.xpose.msra.mxu0 0.0
        %488 = vmatpush.xpose.msra.mxu0 0.0
        %489 = vmatpush.xpose.msra.mxu0 0.0
        %490 = vmatpush.xpose.msra.mxu0 0.0
        %491 = vmatpush.xpose.msra.mxu0 0.0
        %492 = vmatpush.xpose.msra.mxu0 0.0
        %493 = vmatpush.xpose.msra.mxu0 0.0
        %494 = vmatpush.xpose.msra.mxu0 0.0
        %495 = vmatpush.xpose.msra.mxu0 0.0
        %496 = vmatpush.xpose.msra.mxu0 0.0
        %497 = vmatpush.xpose.msra.mxu0 0.0
        %498 = vmatpush.xpose.msra.mxu0 0.0
        %499 = vmatpush.xpose.msra.mxu0 0.0
        %500 = vmatpush.xpose.msra.mxu0 0.0
        %501 = vmatpush.xpose.msra.mxu0 0.0
        %502 = vmatpush.xpose.msra.mxu0 %v485
        %503 = vmatmul.f32.gmra.mxu0 %v483
        %v504 = vpop.f32.mrf.mxu0
        %v505 = vadd.f32 0.0, %v504
        %506 = vdwg.mxu0
        %507 = vrot.lane.b32.xlu0 %v347, 96
        %v508 = vpop.permute.xlu0 %507
        %v509 = vsel %vm352, %v333, 0
        %v511 = vsel %vm352, %v508, 0
        %513 = vmatpush.xpose.msra.mxu0 0.0
        %514 = vmatpush.xpose.msra.mxu0 0.0
        %515 = vmatpush.xpose.msra.mxu0 0.0
        %516 = vmatpush.xpose.msra.mxu0 0.0
        %517 = vmatpush.xpose.msra.mxu0 0.0
        %518 = vmatpush.xpose.msra.mxu0 0.0
        %519 = vmatpush.xpose.msra.mxu0 0.0
        %520 = vmatpush.xpose.msra.mxu0 0.0
        %521 = vmatpush.xpose.msra.mxu0 0.0
        %522 = vmatpush.xpose.msra.mxu0 0.0
        %523 = vmatpush.xpose.msra.mxu0 0.0
        %524 = vmatpush.xpose.msra.mxu0 0.0
        %525 = vmatpush.xpose.msra.mxu0 0.0
        %526 = vmatpush.xpose.msra.mxu0 0.0
        %527 = vmatpush.xpose.msra.mxu0 0.0
        %528 = vmatpush.xpose.msra.mxu0 %v511
        %529 = vmatmul.f32.gmra.mxu0 %v509
        %v530 = vpop.f32.mrf.mxu0
        %v531 = vadd.f32 0.0, %v530
        %532 = vdwg.mxu0
        %533 = vrot.lane.b32.xlu0 %v349, 96
        %v534 = vpop.permute.xlu0 %533
        %v535 = vsel %vm352, %v335, 0
        %v537 = vsel %vm352, %v534, 0
        %539 = vmatpush.xpose.msra.mxu0 0.0
        %540 = vmatpush.xpose.msra.mxu0 0.0
        %541 = vmatpush.xpose.msra.mxu0 0.0
        %542 = vmatpush.xpose.msra.mxu0 0.0
        %543 = vmatpush.xpose.msra.mxu0 0.0
        %544 = vmatpush.xpose.msra.mxu0 0.0
        %545 = vmatpush.xpose.msra.mxu0 0.0
        %546 = vmatpush.xpose.msra.mxu0 0.0
        %547 = vmatpush.xpose.msra.mxu0 0.0
        %548 = vmatpush.xpose.msra.mxu0 0.0
        %549 = vmatpush.xpose.msra.mxu0 0.0
        %550 = vmatpush.xpose.msra.mxu0 0.0
        %551 = vmatpush.xpose.msra.mxu0 0.0
        %552 = vmatpush.xpose.msra.mxu0 0.0
        %553 = vmatpush.xpose.msra.mxu0 0.0
        %554 = vmatpush.xpose.msra.mxu0 %v537
        %555 = vmatmul.f32.gmra.mxu0 %v535
        %v556 = vpop.f32.mrf.mxu0
        %v557 = vadd.f32 0.0, %v556
        %558 = vdwg.mxu0
        %v559 = vsel %vm352, %v375, -inf
        %560 = vmax.xlane.f32.xlu0 %v559
        %v561 = vpop.xlane.xlu0 %560
        %v562 = vsel %vm352, %v401, -inf
        %563 = vmax.xlane.f32.xlu0 %v562
        %v564 = vpop.xlane.xlu0 %563
        %v565 = vsel %vm352, %v427, -inf
        %566 = vmax.xlane.f32.xlu0 %v565
        %v567 = vpop.xlane.xlu0 %566
        %v568 = vsel %vm352, %v453, -inf
        %569 = vmax.xlane.f32.xlu0 %v568
        %v570 = vpop.xlane.xlu0 %569
        %v571 = vsel %vm352, %v479, -inf
        %572 = vmax.xlane.f32.xlu0 %v571
        %v573 = vpop.xlane.xlu0 %572
        %v574 = vsel %vm352, %v505, -inf
        %575 = vmax.xlane.f32.xlu0 %v574
        %v576 = vpop.xlane.xlu0 %575
        %v577 = vsel %vm352, %v531, -inf
        %578 = vmax.xlane.f32.xlu0 %v577
        %v579 = vpop.xlane.xlu0 %578
        %v580 = vsel %vm352, %v557, -inf
        %581 = vmax.xlane.f32.xlu0 %v580
        %v582 = vpop.xlane.xlu0 %581
        %v583 = vsub.f32 %v375, %v561
        %v584 = vsub.f32 %v401, %v564
        %v585 = vsub.f32 %v427, %v567
        %v586 = vsub.f32 %v453, %v570
        %v587 = vsub.f32 %v479, %v573
        %v588 = vsub.f32 %v505, %v576
        %v589 = vsub.f32 %v531, %v579
        %v590 = vsub.f32 %v557, %v582
        %v591 = vmul.f32 %v583, 1.442695
        %v592 = vpow.pop %v591
        %v593 = vmul.f32 %v584, 1.442695
        %v594 = vpow.pop %v593
        %v595 = vmul.f32 %v585, 1.442695
        %v596 = vpow.pop %v595
        %v597 = vmul.f32 %v586, 1.442695
        %v598 = vpow.pop %v597
        %v599 = vmul.f32 %v587, 1.442695
        %v600 = vpow.pop %v599
        %v601 = vmul.f32 %v588, 1.442695
        %v602 = vpow.pop %v601
        %v603 = vmul.f32 %v589, 1.442695
        %v604 = vpow.pop %v603
        %v605 = vmul.f32 %v590, 1.442695
        %v606 = vpow.pop %v605
        %v607 = vsel %vm352, %v592, 0.0
        %608 = vadd.xlane.f32.xlu0 %v607
        %v609 = vpop.xlane.xlu0 %608
        %v610 = vsel %vm352, %v594, 0.0
        %611 = vadd.xlane.f32.xlu0 %v610
        %v612 = vpop.xlane.xlu0 %611
        %v613 = vsel %vm352, %v596, 0.0
        %614 = vadd.xlane.f32.xlu0 %v613
        %v615 = vpop.xlane.xlu0 %614
        %v616 = vsel %vm352, %v598, 0.0
        %617 = vadd.xlane.f32.xlu0 %v616
        %v618 = vpop.xlane.xlu0 %617
        %v619 = vsel %vm352, %v600, 0.0
        %620 = vadd.xlane.f32.xlu0 %v619
        %v621 = vpop.xlane.xlu0 %620
        %v622 = vsel %vm352, %v602, 0.0
        %623 = vadd.xlane.f32.xlu0 %v622
        %v624 = vpop.xlane.xlu0 %623
        %v625 = vsel %vm352, %v604, 0.0
        %626 = vadd.xlane.f32.xlu0 %v625
        %v627 = vpop.xlane.xlu0 %626
        %v628 = vsel %vm352, %v606, 0.0
        %629 = vadd.xlane.f32.xlu0 %v628
        %v630 = vpop.xlane.xlu0 %629
        %v631 = vrcp.pop %v609
        %v632 = vrcp.pop %v612
        %v633 = vrcp.pop %v615
        %v634 = vrcp.pop %v618
        %v635 = vrcp.pop %v621
        %v636 = vrcp.pop %v624
        %v637 = vrcp.pop %v627
        %v638 = vrcp.pop %v630
        %v639 = vmul.f32 %v592, %v631
        %v640 = vmul.f32 %v594, %v632
        %v641 = vmul.f32 %v596, %v633
        %v642 = vmul.f32 %v598, %v634
        %v643 = vmul.f32 %v600, %v635
        %v644 = vmul.f32 %v602, %v636
        %v645 = vmul.f32 %v604, %v637
        %v646 = vmul.f32 %v606, %v638
        %647 = vrot.lane.b32.xlu0 %v315, 64
        %v648 = vpop.permute.xlu0 %647
        %v651 = vsel %vm352, %v639, 0
        %653 = vmatpush.msra.mxu0 0.0
        %654 = vmatpush.msra.mxu0 0.0
        %655 = vmatpush.msra.mxu0 0.0
        %656 = vmatpush.msra.mxu0 0.0
        %657 = vmatpush.msra.mxu0 0.0
        %658 = vmatpush.msra.mxu0 0.0
        %659 = vmatpush.msra.mxu0 0.0
        %660 = vmatpush.msra.mxu0 0.0
        %661 = vmatpush.msra.mxu0 0.0
        %662 = vmatpush.msra.mxu0 0.0
        %663 = vmatpush.msra.mxu0 0.0
        %664 = vmatpush.msra.mxu0 0.0
        %665 = vmatpush.msra.mxu0 0.0
        %666 = vmatpush.msra.mxu0 0.0
        %667 = vmatpush.msra.mxu0 0.0
        %668 = vmatpush.msra.mxu0 %v648
        %669 = vmatmul.f32.gmra.mxu0 %v651
        %v670 = vpop.f32.mrf.mxu0
        %v671 = vadd.f32 0.0, %v670
        %672 = vdwg.mxu0
        %673 = vrot.lane.b32.xlu0 %v338, 64
        %v674 = vpop.permute.xlu0 %673
        %v677 = vsel %vm352, %v640, 0
        %679 = vmatpush.msra.mxu0 0.0
        %680 = vmatpush.msra.mxu0 0.0
        %681 = vmatpush.msra.mxu0 0.0
        %682 = vmatpush.msra.mxu0 0.0
        %683 = vmatpush.msra.mxu0 0.0
        %684 = vmatpush.msra.mxu0 0.0
        %685 = vmatpush.msra.mxu0 0.0
        %686 = vmatpush.msra.mxu0 0.0
        %687 = vmatpush.msra.mxu0 0.0
        %688 = vmatpush.msra.mxu0 0.0
        %689 = vmatpush.msra.mxu0 0.0
        %690 = vmatpush.msra.mxu0 0.0
        %691 = vmatpush.msra.mxu0 0.0
        %692 = vmatpush.msra.mxu0 0.0
        %693 = vmatpush.msra.mxu0 0.0
        %694 = vmatpush.msra.mxu0 %v674
        %695 = vmatmul.f32.gmra.mxu0 %v677
        %v696 = vpop.f32.mrf.mxu0
        %v697 = vadd.f32 0.0, %v696
        %698 = vdwg.mxu0
        %699 = vrot.lane.b32.xlu0 %v340, 64
        %v700 = vpop.permute.xlu0 %699
        %v703 = vsel %vm352, %v641, 0
        %705 = vmatpush.msra.mxu0 0.0
        %706 = vmatpush.msra.mxu0 0.0
        %707 = vmatpush.msra.mxu0 0.0
        %708 = vmatpush.msra.mxu0 0.0
        %709 = vmatpush.msra.mxu0 0.0
        %710 = vmatpush.msra.mxu0 0.0
        %711 = vmatpush.msra.mxu0 0.0
        %712 = vmatpush.msra.mxu0 0.0
        %713 = vmatpush.msra.mxu0 0.0
        %714 = vmatpush.msra.mxu0 0.0
        %715 = vmatpush.msra.mxu0 0.0
        %716 = vmatpush.msra.mxu0 0.0
        %717 = vmatpush.msra.mxu0 0.0
        %718 = vmatpush.msra.mxu0 0.0
        %719 = vmatpush.msra.mxu0 0.0
        %720 = vmatpush.msra.mxu0 %v700
        %721 = vmatmul.f32.gmra.mxu0 %v703
        %v722 = vpop.f32.mrf.mxu0
        %v723 = vadd.f32 0.0, %v722
        %724 = vdwg.mxu0
        %725 = vrot.lane.b32.xlu0 %v342, 64
        %v726 = vpop.permute.xlu0 %725
        %v729 = vsel %vm352, %v642, 0
        %731 = vmatpush.msra.mxu0 0.0
        %732 = vmatpush.msra.mxu0 0.0
        %733 = vmatpush.msra.mxu0 0.0
        %734 = vmatpush.msra.mxu0 0.0
        %735 = vmatpush.msra.mxu0 0.0
        %736 = vmatpush.msra.mxu0 0.0
        %737 = vmatpush.msra.mxu0 0.0
        %738 = vmatpush.msra.mxu0 0.0
        %739 = vmatpush.msra.mxu0 0.0
        %740 = vmatpush.msra.mxu0 0.0
        %741 = vmatpush.msra.mxu0 0.0
        %742 = vmatpush.msra.mxu0 0.0
        %743 = vmatpush.msra.mxu0 0.0
        %744 = vmatpush.msra.mxu0 0.0
        %745 = vmatpush.msra.mxu0 0.0
        %746 = vmatpush.msra.mxu0 %v726
        %747 = vmatmul.f32.gmra.mxu0 %v729
        %v748 = vpop.f32.mrf.mxu0
        %v749 = vadd.f32 0.0, %v748
        %750 = vdwg.mxu0
        %751 = vrot.lane.b32.xlu0 %v318, 64
        %v752 = vpop.permute.xlu0 %751
        %v755 = vsel %vm352, %v643, 0
        %757 = vmatpush.msra.mxu0 0.0
        %758 = vmatpush.msra.mxu0 0.0
        %759 = vmatpush.msra.mxu0 0.0
        %760 = vmatpush.msra.mxu0 0.0
        %761 = vmatpush.msra.mxu0 0.0
        %762 = vmatpush.msra.mxu0 0.0
        %763 = vmatpush.msra.mxu0 0.0
        %764 = vmatpush.msra.mxu0 0.0
        %765 = vmatpush.msra.mxu0 0.0
        %766 = vmatpush.msra.mxu0 0.0
        %767 = vmatpush.msra.mxu0 0.0
        %768 = vmatpush.msra.mxu0 0.0
        %769 = vmatpush.msra.mxu0 0.0
        %770 = vmatpush.msra.mxu0 0.0
        %771 = vmatpush.msra.mxu0 0.0
        %772 = vmatpush.msra.mxu0 %v752
        %773 = vmatmul.f32.gmra.mxu0 %v755
        %v774 = vpop.f32.mrf.mxu0
        %v775 = vadd.f32 0.0, %v774
        %776 = vdwg.mxu0
        %777 = vrot.lane.b32.xlu0 %v345, 64
        %v778 = vpop.permute.xlu0 %777
        %v781 = vsel %vm352, %v644, 0
        %783 = vmatpush.msra.mxu0 0.0
        %784 = vmatpush.msra.mxu0 0.0
        %785 = vmatpush.msra.mxu0 0.0
        %786 = vmatpush.msra.mxu0 0.0
        %787 = vmatpush.msra.mxu0 0.0
        %788 = vmatpush.msra.mxu0 0.0
        %789 = vmatpush.msra.mxu0 0.0
        %790 = vmatpush.msra.mxu0 0.0
        %791 = vmatpush.msra.mxu0 0.0
        %792 = vmatpush.msra.mxu0 0.0
        %793 = vmatpush.msra.mxu0 0.0
        %794 = vmatpush.msra.mxu0 0.0
        %795 = vmatpush.msra.mxu0 0.0
        %796 = vmatpush.msra.mxu0 0.0
        %797 = vmatpush.msra.mxu0 0.0
        %798 = vmatpush.msra.mxu0 %v778
        %799 = vmatmul.f32.gmra.mxu0 %v781
        %v800 = vpop.f32.mrf.mxu0
        %v801 = vadd.f32 0.0, %v800
        %802 = vdwg.mxu0
        %803 = vrot.lane.b32.xlu0 %v347, 64
        %v804 = vpop.permute.xlu0 %803
        %v807 = vsel %vm352, %v645, 0
        %809 = vmatpush.msra.mxu0 0.0
        %810 = vmatpush.msra.mxu0 0.0
        %811 = vmatpush.msra.mxu0 0.0
        %812 = vmatpush.msra.mxu0 0.0
        %813 = vmatpush.msra.mxu0 0.0
        %814 = vmatpush.msra.mxu0 0.0
        %815 = vmatpush.msra.mxu0 0.0
        %816 = vmatpush.msra.mxu0 0.0
        %817 = vmatpush.msra.mxu0 0.0
        %818 = vmatpush.msra.mxu0 0.0
        %819 = vmatpush.msra.mxu0 0.0
        %820 = vmatpush.msra.mxu0 0.0
        %821 = vmatpush.msra.mxu0 0.0
        %822 = vmatpush.msra.mxu0 0.0
        %823 = vmatpush.msra.mxu0 0.0
        %824 = vmatpush.msra.mxu0 %v804
        %825 = vmatmul.f32.gmra.mxu0 %v807
        %v826 = vpop.f32.mrf.mxu0
        %v827 = vadd.f32 0.0, %v826
        %828 = vdwg.mxu0
        %829 = vrot.lane.b32.xlu0 %v349, 64
        %v830 = vpop.permute.xlu0 %829
        %v833 = vsel %vm352, %v646, 0
        %835 = vmatpush.msra.mxu0 0.0
        %836 = vmatpush.msra.mxu0 0.0
        %837 = vmatpush.msra.mxu0 0.0
        %838 = vmatpush.msra.mxu0 0.0
        %839 = vmatpush.msra.mxu0 0.0
        %840 = vmatpush.msra.mxu0 0.0
        %841 = vmatpush.msra.mxu0 0.0
        %842 = vmatpush.msra.mxu0 0.0
        %843 = vmatpush.msra.mxu0 0.0
        %844 = vmatpush.msra.mxu0 0.0
        %845 = vmatpush.msra.mxu0 0.0
        %846 = vmatpush.msra.mxu0 0.0
        %847 = vmatpush.msra.mxu0 0.0
        %848 = vmatpush.msra.mxu0 0.0
        %849 = vmatpush.msra.mxu0 0.0
        %850 = vmatpush.msra.mxu0 %v830
        %851 = vmatmul.f32.gmra.mxu0 %v833
        %v852 = vpop.f32.mrf.mxu0
        %v853 = vadd.f32 0.0, %v852
        %854 = vdwg.mxu0
        %856 = vrot.lane.b32.xlu0 %v697, 8
        %v857 = vpop.permute.xlu0 %856
        %860 = vrot.lane.b32.xlu0 %v723, 16
        %v861 = vpop.permute.xlu0 %860
        %864 = vrot.lane.b32.xlu0 %v749, 24
        %v865 = vpop.permute.xlu0 %864
        %v867 = vsel %vm352, %v671, %v857
        %vm868 = vcmask 130048
        %v869 = vsel %vm868, %v867, %v861
        %vm870 = vcmask 195584
        %v871 = vsel %vm870, %v869, %v865
        %873 = vrot.lane.b32.xlu0 %v801, 8
        %v874 = vpop.permute.xlu0 %873
        %877 = vrot.lane.b32.xlu0 %v827, 16
        %v878 = vpop.permute.xlu0 %877
        %881 = vrot.lane.b32.xlu0 %v853, 24
        %v882 = vpop.permute.xlu0 %881
        %v884 = vsel %vm352, %v775, %v874
        %v885 = vsel %vm868, %v884, %v878
        %v886 = vsel %vm870, %v885, %v882
        %v887 = vld [vmem:[#allocation7] sm:$0xff]
        %v888 = vld [vmem:[#allocation7 + $0x8] sm:$0xff]
        %v889 = vld [vmem:[#allocation7 + $0x10] sm:$0xff]
        %v890 = vld [vmem:[#allocation7 + $0x18] sm:$0xff]
        %v891 = vld [vmem:[%s4] sm:$0x1]
        %v893 = vperm.slane %v891, 0
        %v896 = vsel %vm290, %v871, 0
        %v899 = vsel %vm290, %v886, 0
        %901 = vmatpush.msra.mxu0 0.0
        %902 = vmatpush.msra.mxu0 0.0
        %903 = vmatpush.msra.mxu0 0.0
        %904 = vmatpush.msra.mxu0 0.0
        %905 = vmatpush.msra.mxu0 0.0
        %906 = vmatpush.msra.mxu0 0.0
        %907 = vmatpush.msra.mxu0 0.0
        %908 = vmatpush.msra.mxu0 0.0
        %909 = vmatpush.msra.mxu0 0.0
        %910 = vmatpush.msra.mxu0 0.0
        %911 = vmatpush.msra.mxu0 0.0
        %912 = vmatpush.msra.mxu0 0.0
        %913 = vmatpush.msra.mxu0 %v890
        %914 = vmatpush.msra.mxu0 %v889
        %915 = vmatpush.msra.mxu0 %v888
        %916 = vmatpush.msra.mxu0 %v887
        %917 = vmatmul.f32.gmra.mxu0 %v896
        %v918 = vpop.f32.mrf.mxu0
        %v919 = vadd.f32 %v893, %v918
        %920 = vmatmul.f32.gmra.mxu0 %v899
        %v921 = vpop.f32.mrf.mxu0
        %v922 = vadd.f32 %v893, %v921
        %923 = vdwg.mxu0
        %924 = vst.msk [vmem:[%s277] sm:$0xff] %vm290, %v919
        %925 = vst.msk [vmem:[%s277 + $0x8] sm:$0xff] %vm290, %v922
        %s926 = sand.u32 %s141, 1
        %s927 = scalar_lea.sflag [#allocation4], %s926
        %s928 = sand.u32 %s141, 1
        %s929 = smul.addr %s928, 16
        %s930 = scalar_lea.vmem [#allocation8], %s929
        // Predicated region
        $region53: #{tpu_custom_call.1} parent=39 // pred_check
          %p931 = pneg %p151
        $region54: #{tpu_custom_call.1} parent=39 // pred_check_branch
          %933 = sbr.rel (%p931) target = $region56
        $region55: #{tpu_custom_call.1} parent=39 // pred_region
          %s934 = smul.u32 2, %s23
          %936 = vsyncadd %s927, 0
          %s937 = smul.addr %s934, 8
          %s938 = scalar_lea.hbm %s5, %s937
          %s939 = sshll.u32 %s930, 4
          %s940 = int_to_ptr.vmem [resolvable:$true] %s939
          %s941 = sshll.u32 %s938, 4
          %s942 = int_to_ptr.hbm [resolvable:$true] %s941
          %947 = dma.vmem_to_hbm [thread:$0]  %s940, 256, %s942, %s927, 128, 128, 8
        $region56: #{tpu_custom_call.1} parent=39 // pred_fallthru
          _
      $region40: #{tpu_custom_call.1} parent=5 // pred_fallthru
        _
      %p948 = scmp.le.s32.totalorder 2, %s18
      // Predicated region
      $region57: #{tpu_custom_call.1} parent=5 // pred_check
        %p949 = pneg %p948
      $region58: #{tpu_custom_call.1} parent=5 // pred_check_branch
        %951 = sbr.rel (%p949) target = $region60
      $region59: #{tpu_custom_call.1} parent=5 // pred_region
        %s952 = ssub.s32 %s18, 2
        // Predicated region
        $region61: #{tpu_custom_call.1} parent=59 // pred_check
          %p953 = pneg %p157
        $region62: #{tpu_custom_call.1} parent=59 // pred_check_branch
          %955 = sbr.rel (%p953) target = $region64
        $region63: #{tpu_custom_call.1} parent=59 // pred_region
          %s956 = sand.u32 %s142, 1
          %s957 = scalar_lea.sflag [#allocation4], %s956
          %s958 = sand.u32 %s142, 1
          %s959 = smul.addr %s958, 16
          %s960 = scalar_lea.vmem [#allocation8], %s959
          %962 = dma.done %s957, 256
        $region64: #{tpu_custom_call.1} parent=59 // pred_fallthru
          _
      $region60: #{tpu_custom_call.1} parent=5 // pred_fallthru
        _
    $region6: #{tpu_custom_call.1} parent=1 // loop_footer
      %s22 = sadd.s32 1, %s18
    $region7: #{tpu_custom_call.1} parent=1 // loop_footer_branch
      %17 = sbr.rel target = $region3
    $region8: #{tpu_custom_call.1} parent=1 // loop_exit
      _
    %963 = vsyncpa [#allocation3], 1
    %s964 = scalar_lea.sflag [#allocation3], 1
    %965 = vsyncpa %s964, 1
    %966 = vsyncpa [#allocation6], 1
    %967 = vsyncpa [#allocation4], 1
    %s968 = scalar_lea.sflag [#allocation4], 1
    %969 = vsyncpa %s968, 1

// kernel: tpu_custom_call.1
$region0: #{tpu_custom_call.1}
  #allocation0 [shape = 'u32[]', space=smem, size = 0x4, offset = 0x4, fixed_abs, tag = 'smem constant byte address 0x4 - core index']
  #allocation1 [shape = 'u32[72,128]{1,0:T(1,128)}', space=vmem, size = 0x9000, scoped, tag = 'internal scratch']
  %s0 = inlined_call_operand.hbm [shape: f32[32,32], index: 0, kind: input, shape index: {}]
  %s1 = inlined_call_operand.hbm [shape: f32[32,96], index: 1, kind: input, shape index: {}]
  %s2 = inlined_call_operand.vmem [shape: f32[1,96], index: 2, kind: input, shape index: {}]
  %s3 = inlined_call_operand.hbm [shape: f32[32,32], index: 3, kind: input, shape index: {}]
  %s4 = inlined_call_operand.vmem [shape: f32[1,32], index: 4, kind: input, shape index: {}]
  %s5 = inlined_call_operand.hbm [shape: f32[32,32], index: 5, kind: output, shape index: {}]
  %s6 = sld [smem:[#allocation0]]
  $region65: #{tpu_custom_call.1} parent=0
    _
  %s8 = ssub.s32 1, %s6
  %s9 = scalar_select 0, %s8, %s6
  $region1: #{tpu_custom_call.1} parent=0
    #allocation2 [shape = 'u8[16384]{0}', space=vmem, size = 0x4000, scoped, tag = 'input window, operand 0']
    #allocation3 [shape = 's32[2]{0}', space=sflag, size = 0x8, scoped, tag = 'scoped memory for tpu_custom_call.1']
    #allocation4 [shape = 's32[2]{0}', space=sflag, size = 0x8, scoped, tag = 'scoped memory for tpu_custom_call.1']
    #allocation5 [shape = 'u8[16384]{0}', space=vmem, size = 0x4000, scoped, tag = 'input window, operand 1, single buffered']
    #allocation6 [shape = 's32[1]{0}', space=sflag, size = 0x4, scoped, tag = 'scoped memory for tpu_custom_call.1']
    #allocation7 [shape = 'u8[16384]{0}', space=vmem, size = 0x4000, scoped, tag = 'input window, operand 3, single buffered']
    #allocation8 [shape = 'u8[16384]{0}', space=vmem, size = 0x4000, scoped, tag = 'output window, operand 0']
    %10 = vsyncpa [#allocation3], 0
    %s11 = scalar_lea.sflag [#allocation3], 1
    %12 = vsyncpa %s11, 0
    %13 = vsyncpa [#allocation6], 0
    %14 = vsyncpa [#allocation4], 0
    %s15 = scalar_lea.sflag [#allocation4], 1
    %16 = vsyncpa %s15, 0
    loop: start=0, step=1, limit=4
    $region2: #{tpu_custom_call.1} parent=1 // loop_pre_header
      _
    $region3: #{tpu_custom_call.1} parent=1 // loop_header
      %s18 = sphi 0, %s22
      %p19 = scmp.ge.s32.totalorder %s18, 4
      %s28 = sphi 0, %s30
      %s31 = sphi 0, %s28
      %s32 = sphi 0, %s31
      %s48 = sphi 0, %s32
      %s52 = sphi 0, %s52
      %s54 = sphi 0, %s52
      %s55 = sphi 0, %s54
      %s69 = sphi 0, %s55
      %s73 = sphi 0, %s73
      %s75 = sphi 0, %s73
      %s76 = sphi 0, %s75
      %s90 = sphi 0, %s76
      %s94 = sphi 0, %s94
      %s96 = sphi 0, %s94
      %s97 = sphi 0, %s96
      %s111 = sphi 0, %s97
      %s115 = sphi 0, %s115
      %s117 = sphi 0, %s115
      %s118 = sphi 0, %s117
      %s132 = sphi 0, %s118
      %s138 = sphi 0, %s140
      %s141 = sphi 0, %s138
      %s142 = sphi 0, %s141
      %s158 = sphi 0, %s142
    $region4: #{tpu_custom_call.1} parent=1 // loop_header_branch
      %21 = sbr.rel (%p19) target = $region8
    $region5: #{tpu_custom_call.1} parent=1 // loop_body
      %s23 = ssub.s32 %s18, 1
      %s24 = ssub.s32 %s18, 2
      %s25 = sadd.s32 %s18, 1
      %s26 = ssub.s32 %s18, %s25
      %p27 = scmp.eq.s32.totalorder %s26, 0
      %s29 = sadd.s32 %s28, 1
      %s30 = scalar_select %p27, %s28, %s29
      %p33 = pneg %p27
      %p34 = scmp.eq.s32.totalorder %s18, 1
      %p35 = por %p33, %p34
      %p36 = scmp.ne.s32.totalorder %s28, %s31
      %p37 = scmp.eq.s32.totalorder %s18, 0
      %p38 = por %p36, %p37
      %p39 = scmp.ne.s32.totalorder %s28, %s31
      %p40 = scmp.eq.s32.totalorder %s23, 1
      %p41 = por %p39, %p40
      %p42 = scmp.ne.s32.totalorder %s31, %s32
      %p43 = scmp.eq.s32.totalorder %s23, 0
      %p44 = por %p42, %p43
      %p45 = scmp.ne.s32.totalorder %s31, %s32
      %p46 = scmp.eq.s32.totalorder %s24, 1
      %p47 = por %p45, %p46
      %p49 = scmp.ne.s32.totalorder %s32, %s48
      %p50 = scmp.eq.s32.totalorder %s24, 0
      %p51 = por %p49, %p50
      %s53 = sadd.s32 %s52, 1
      %p56 = scmp.eq.s32.totalorder %s18, 1
      %p57 = scmp.ne.s32.totalorder %s52, %s54
      %p58 = scmp.eq.s32.totalorder %s18, 0
      %p59 = por %p57, %p58
      %p60 = scmp.ne.s32.totalorder %s52, %s54
      %p61 = scmp.eq.s32.totalorder %s23, 1
      %p62 = por %p60, %p61
      %p63 = scmp.ne.s32.totalorder %s54, %s55
      %p64 = scmp.eq.s32.totalorder %s23, 0
      %p65 = por %p63, %p64
      %p66 = scmp.ne.s32.totalorder %s54, %s55
      %p67 = scmp.eq.s32.totalorder %s24, 1
      %p68 = por %p66, %p67
      %p70 = scmp.ne.s32.totalorder %s55, %s69
      %p71 = scmp.eq.s32.totalorder %s24, 0
      %p72 = por %p70, %p71
      %s74 = sadd.s32 %s73, 1
      %p77 = scmp.eq.s32.totalorder %s18, 1
      %p78 = scmp.ne.s32.totalorder %s73, %s75
      %p79 = scmp.eq.s32.totalorder %s18, 0
      %p80 = por %p78, %p79
      %p81 = scmp.ne.s32.totalorder %s73, %s75
      %p82 = scmp.eq.s32.totalorder %s23, 1
      %p83 = por %p81, %p82
      %p84 = scmp.ne.s32.totalorder %s75, %s76
      %p85 = scmp.eq.s32.totalorder %s23, 0
      %p86 = por %p84, %p85
      %p87 = scmp.ne.s32.totalorder %s75, %s76
      %p88 = scmp.eq.s32.totalorder %s24, 1
      %p89 = por %p87, %p88
      %p91 = scmp.ne.s32.totalorder %s76, %s90
      %p92 = scmp.eq.s32.totalorder %s24, 0
      %p93 = por %p91, %p92
      %s95 = sadd.s32 %s94, 1
      %p98 = scmp.eq.s32.totalorder %s18, 1
      %p99 = scmp.ne.s32.totalorder %s94, %s96
      %p100 = scmp.eq.s32.totalorder %s18, 0
      %p101 = por %p99, %p100
      %p102 = scmp.ne.s32.totalorder %s94, %s96
      %p103 = scmp.eq.s32.totalorder %s23, 1
      %p104 = por %p102, %p103
      %p105 = scmp.ne.s32.totalorder %s96, %s97
      %p106 = scmp.eq.s32.totalorder %s23, 0
      %p107 = por %p105, %p106
      %p108 = scmp.ne.s32.totalorder %s96, %s97
      %p109 = scmp.eq.s32.totalorder %s24, 1
      %p110 = por %p108, %p109
      %p112 = scmp.ne.s32.totalorder %s97, %s111
      %p113 = scmp.eq.s32.totalorder %s24, 0
      %p114 = por %p112, %p113
      %s116 = sadd.s32 %s115, 1
      %p119 = scmp.eq.s32.totalorder %s18, 1
      %p120 = scmp.ne.s32.totalorder %s115, %s117
      %p121 = scmp.eq.s32.totalorder %s18, 0
      %p122 = por %p120, %p121
      %p123 = scmp.ne.s32.totalorder %s115, %s117
      %p124 = scmp.eq.s32.totalorder %s23, 1
      %p125 = por %p123, %p124
      %p126 = scmp.ne.s32.totalorder %s117, %s118
      %p127 = scmp.eq.s32.totalorder %s23, 0
      %p128 = por %p126, %p127
      %p129 = scmp.ne.s32.totalorder %s117, %s118
      %p130 = scmp.eq.s32.totalorder %s24, 1
      %p131 = por %p129, %p130
      %p133 = scmp.ne.s32.totalorder %s118, %s132
      %p134 = scmp.eq.s32.totalorder %s24, 0
      %p135 = por %p133, %p134
      %s136 = ssub.s32 %s18, %s25
      %p137 = scmp.eq.s32.totalorder %s136, 0
      %s139 = sadd.s32 %s138, 1
      %s140 = scalar_select %p137, %s138, %s139
      %p143 = pneg %p137
      %p144 = scmp.eq.s32.totalorder %s18, 1
      %p145 = por %p143, %p144
      %p146 = scmp.ne.s32.totalorder %s138, %s141
      %p147 = scmp.eq.s32.totalorder %s18, 0
      %p148 = por %p146, %p147
      %p149 = scmp.ne.s32.totalorder %s138, %s141
      %p150 = scmp.eq.s32.totalorder %s23, 1
      %p151 = por %p149, %p150
      %p152 = scmp.ne.s32.totalorder %s141, %s142
      %p153 = scmp.eq.s32.totalorder %s23, 0
      %p154 = por %p152, %p153
      %p155 = scmp.ne.s32.totalorder %s141, %s142
      %p156 = scmp.eq.s32.totalorder %s24, 1
      %p157 = por %p155, %p156
      %p159 = scmp.ne.s32.totalorder %s142, %s158
      %p160 = scmp.eq.s32.totalorder %s24, 0
      %p161 = por %p159, %p160
      %p162 = scmp.le.s32.totalorder 1, %s18
      %p163 = scmp.lt.s32.totalorder %s18, 3
      %p164 = pnand %p162, %p163
      %p165 = pneg %p164
      // Predicated region
      $region9: #{tpu_custom_call.1} parent=5 // pred_check
        _
      $region10: #{tpu_custom_call.1} parent=5 // pred_check_branch
        %167 = sbr.rel (%p164) target = $region12
      $region11: #{tpu_custom_call.1} parent=5 // pred_region
        %s168 = ssub.s32 %s18, 1
        // Predicated region
        $region13: #{tpu_custom_call.1} parent=11 // pred_check
          %p169 = pneg %p65
        $region14: #{tpu_custom_call.1} parent=11 // pred_check_branch
          %171 = sbr.rel (%p169) target = $region16
        $region15: #{tpu_custom_call.1} parent=11 // pred_region
          %173 = vsyncadd [#allocation6], 0
          %s174 = sshll.u32 %s1, 4
          %s175 = int_to_ptr.hbm [resolvable:$true] %s174
          %s176 = sshll.u32 [#allocation5], 4
          %s177 = int_to_ptr.vmem [resolvable:$true] %s176
          %182 = dma.hbm_to_vmem [thread:$0]  %s175, 512, %s177, [#allocation6], 128, 128, 8
        $region16: #{tpu_custom_call.1} parent=11 // pred_fallthru
          _
        // Predicated region
        $region17: #{tpu_custom_call.1} parent=11 // pred_check
          %p183 = pneg %p86
        $region18: #{tpu_custom_call.1} parent=11 // pred_check_branch
          %185 = sbr.rel (%p183) target = $region20
        $region19: #{tpu_custom_call.1} parent=11 // pred_region
          _
        $region20: #{tpu_custom_call.1} parent=11 // pred_fallthru
          _
        // Predicated region
        $region21: #{tpu_custom_call.1} parent=11 // pred_check
          %p186 = pneg %p107
        $region22: #{tpu_custom_call.1} parent=11 // pred_check_branch
          %188 = sbr.rel (%p186) target = $region24
        $region23: #{tpu_custom_call.1} parent=11 // pred_region
          %190 = vsyncadd [#allocation6], 0
          %s191 = sshll.u32 %s3, 4
          %s192 = int_to_ptr.hbm [resolvable:$true] %s191
          %s193 = sshll.u32 [#allocation7], 4
          %s194 = int_to_ptr.vmem [resolvable:$true] %s193
          %199 = dma.hbm_to_vmem [thread:$0]  %s192, 512, %s194, [#allocation6], 128, 128, 8
        $region24: #{tpu_custom_call.1} parent=11 // pred_fallthru
          _
        // Predicated region
        $region25: #{tpu_custom_call.1} parent=11 // pred_check
          %p200 = pneg %p128
        $region26: #{tpu_custom_call.1} parent=11 // pred_check_branch
          %202 = sbr.rel (%p200) target = $region28
        $region27: #{tpu_custom_call.1} parent=11 // pred_region
          _
        $region28: #{tpu_custom_call.1} parent=11 // pred_fallthru
          _
      $region12: #{tpu_custom_call.1} parent=5 // pred_fallthru
        _
      %p203 = scmp.lt.s32.totalorder %s18, 2
      // Predicated region
      $region29: #{tpu_custom_call.1} parent=5 // pred_check
        %p204 = pneg %p203
      $region30: #{tpu_custom_call.1} parent=5 // pred_check_branch
        %206 = sbr.rel (%p204) target = $region32
      $region31: #{tpu_custom_call.1} parent=5 // pred_region
        // Predicated region
        $region33: #{tpu_custom_call.1} parent=31 // pred_check
          %p207 = pneg %p38
        $region34: #{tpu_custom_call.1} parent=31 // pred_check_branch
          %209 = sbr.rel (%p207) target = $region36
        $region35: #{tpu_custom_call.1} parent=31 // pred_region
          %s210 = sand.u32 %s28, 1
          %s211 = scalar_lea.sflag [#allocation3], %s210
          %s212 = sand.u32 %s28, 1
          %s213 = smul.addr %s212, 16
          %s214 = scalar_lea.vmem [#allocation2], %s213
          %s215 = smul.u32 2, %s18
          %217 = vsyncadd %s211, 0
          %s218 = smul.addr %s215, 8
          %s219 = scalar_lea.hbm %s0, %s218
          %s220 = sshll.u32 %s219, 4
          %s221 = int_to_ptr.hbm [resolvable:$true] %s220
          %s222 = sshll.u32 %s214, 4
          %s223 = int_to_ptr.vmem [resolvable:$true] %s222
          %228 = dma.hbm_to_vmem [thread:$0]  %s221, 256, %s223, %s211, 128, 128, 8
        $region36: #{tpu_custom_call.1} parent=31 // pred_fallthru
          _
      $region32: #{tpu_custom_call.1} parent=5 // pred_fallthru
        _
      %p229 = scmp.le.s32.totalorder 1, %s18
      %p230 = scmp.lt.s32.totalorder %s18, 3
      %p231 = pnand %p229, %p230
      %p232 = pneg %p231
      // Predicated region
      $region37: #{tpu_custom_call.1} parent=5 // pred_check
        _
      $region38: #{tpu_custom_call.1} parent=5 // pred_check_branch
        %234 = sbr.rel (%p231) target = $region40
      $region39: #{tpu_custom_call.1} parent=5 // pred_region
        %s235 = ssub.s32 %s18, 1
        %s236 = sand.u32 %s31, 1
        %s237 = scalar_lea.sflag [#allocation3], %s236
        %s238 = sand.u32 %s31, 1
        %s239 = smul.addr %s238, 16
        %s240 = scalar_lea.vmem [#allocation2], %s239
        // Predicated region
        $region41: #{tpu_custom_call.1} parent=39 // pred_check
          %p241 = pneg %p44
        $region42: #{tpu_custom_call.1} parent=39 // pred_check_branch
          %243 = sbr.rel (%p241) target = $region44
        $region43: #{tpu_custom_call.1} parent=39 // pred_region
          %245 = dma.done %s237, 256
        $region44: #{tpu_custom_call.1} parent=39 // pred_fallthru
          _
        // Predicated region
        $region45: #{tpu_custom_call.1} parent=39 // pred_check
          %p246 = pneg %p65
        $region46: #{tpu_custom_call.1} parent=39 // pred_check_branch
          %248 = sbr.rel (%p246) target = $region48
        $region47: #{tpu_custom_call.1} parent=39 // pred_region
          %250 = dma.done [#allocation6], 512
        $region48: #{tpu_custom_call.1} parent=39 // pred_fallthru
          _
        // Predicated region
        $region49: #{tpu_custom_call.1} parent=39 // pred_check
          %p251 = pneg %p107
        $region50: #{tpu_custom_call.1} parent=39 // pred_check_branch
          %253 = sbr.rel (%p251) target = $region52
        $region51: #{tpu_custom_call.1} parent=39 // pred_region
          %255 = dma.done [#allocation6], 512
        $region52: #{tpu_custom_call.1} parent=39 // pred_fallthru
          _
        %s256 = sand.u32 %s31, 1
        %s257 = scalar_lea.sflag [#allocation3], %s256
        %s258 = sand.u32 %s31, 1
        %s259 = smul.addr %s258, 16
        %s260 = scalar_lea.vmem [#allocation2], %s259
        %p261 = pneg %p44
        %p262 = pneg %p41
        %p263 = pneg %p65
        %p264 = pneg %p62
        %p265 = pneg %p86
        %p266 = pneg %p83
        %p267 = pneg %p107
        %p268 = pneg %p104
        %p269 = pneg %p128
        %p270 = pneg %p125
        %p271 = pneg %p154
        %p272 = pneg %p151
        %s273 = sand.u32 %s141, 1
        %s274 = scalar_lea.sflag [#allocation4], %s273
        %s275 = sand.u32 %s141, 1
        %s276 = smul.addr %s275, 16
        %s277 = scalar_lea.vmem [#allocation8], %s276
        %s278 = smul.u32 2, %s23
        %s279 = smul.u32 2, %s23
        %v280 = vld [vmem:[%s240] sm:$0xff]
        %v281 = vld [vmem:[%s240 + $0x8] sm:$0xff]
        %v282 = vld [vmem:[#allocation5] sm:$0xff]
        %v283 = vld [vmem:[#allocation5 + $0x8] sm:$0xff]
        %v284 = vld [vmem:[#allocation5 + $0x10] sm:$0xff]
        %v285 = vld [vmem:[#allocation5 + $0x18] sm:$0xff]
        %v286 = vld [vmem:[%s2] sm:$0x1]
        %v288 = vperm.slane %v286, 0
        %vm290 = vcmask 261120
        %v292 = vsel %vm290, %v280, 0
        %v295 = vsel %vm290, %v281, 0
        %297 = vmatpush.msra.mxu0 0.0
        %298 = vmatpush.msra.mxu0 0.0
        %299 = vmatpush.msra.mxu0 0.0
        %300 = vmatpush.msra.mxu0 0.0
        %301 = vmatpush.msra.mxu0 0.0
        %302 = vmatpush.msra.mxu0 0.0
        %303 = vmatpush.msra.mxu0 0.0
        %304 = vmatpush.msra.mxu0 0.0
        %305 = vmatpush.msra.mxu0 0.0
        %306 = vmatpush.msra.mxu0 0.0
        %307 = vmatpush.msra.mxu0 0.0
        %308 = vmatpush.msra.mxu0 0.0
        %309 = vmatpush.msra.mxu0 %v285
        %310 = vmatpush.msra.mxu0 %v284
        %311 = vmatpush.msra.mxu0 %v283
        %312 = vmatpush.msra.mxu0 %v282
        %313 = vmatmul.f32.gmra.mxu0 %v292
        %v314 = vpop.f32.mrf.mxu0
        %v315 = vadd.f32 %v288, %v314
        %316 = vmatmul.f32.gmra.mxu0 %v295
        %v317 = vpop.f32.mrf.mxu0
        %v318 = vadd.f32 %v288, %v317
        %319 = vdwg.mxu0
        %v320 = vmul.f32 %v315, 0.35355338
        %v321 = vmul.f32 %v318, 0.35355338
        %323 = vrot.lane.b32.xlu0 %v320, 120
        %v324 = vpop.permute.xlu0 %323
        %325 = vrot.lane.b32.xlu0 %v320, 112
        %v326 = vpop.permute.xlu0 %325
        %327 = vrot.lane.b32.xlu0 %v320, 104
        %v328 = vpop.permute.xlu0 %327
        %330 = vrot.lane.b32.xlu0 %v321, 120
        %v331 = vpop.permute.xlu0 %330
        %332 = vrot.lane.b32.xlu0 %v321, 112
        %v333 = vpop.permute.xlu0 %332
        %334 = vrot.lane.b32.xlu0 %v321, 104
        %v335 = vpop.permute.xlu0 %334
        %337 = vrot.lane.b32.xlu0 %v315, 120
        %v338 = vpop.permute.xlu0 %337
        %339 = vrot.lane.b32.xlu0 %v315, 112
        %v340 = vpop.permute.xlu0 %339
        %341 = vrot.lane.b32.xlu0 %v315, 104
        %v342 = vpop.permute.xlu0 %341
        %344 = vrot.lane.b32.xlu0 %v318, 120
        %v345 = vpop.permute.xlu0 %344
        %346 = vrot.lane.b32.xlu0 %v318, 112
        %v347 = vpop.permute.xlu0 %346
        %348 = vrot.lane.b32.xlu0 %v318, 104
        %v349 = vpop.permute.xlu0 %348
        %350 = vrot.lane.b32.xlu0 %v315, 96
        %v351 = vpop.permute.xlu0 %350
        %vm352 = vcmask 64512
        %v353 = vsel %vm352, %v320, 0
        %v355 = vsel %vm352, %v351, 0
        %357 = vmatpush.xpose.msra.mxu0 0.0
        %358 = vmatpush.xpose.msra.mxu0 0.0
        %359 = vmatpush.xpose.msra.mxu0 0.0
        %360 = vmatpush.xpose.msra.mxu0 0.0
        %361 = vmatpush.xpose.msra.mxu0 0.0
        %362 = vmatpush.xpose.msra.mxu0 0.0
        %363 = vmatpush.xpose.msra.mxu0 0.0
        %364 = vmatpush.xpose.msra.mxu0 0.0
        %365 = vmatpush.xpose.msra.mxu0 0.0
        %366 = vmatpush.xpose.msra.mxu0 0.0
        %367 = vmatpush.xpose.msra.mxu0 0.0
        %368 = vmatpush.xpose.msra.mxu0 0.0
        %369 = vmatpush.xpose.msra.mxu0 0.0
        %370 = vmatpush.xpose.msra.mxu0 0.0
        %371 = vmatpush.xpose.msra.mxu0 0.0
        %372 = vmatpush.xpose.msra.mxu0 %v355
        %373 = vmatmul.f32.gmra.mxu0 %v353
        %v374 = vpop.f32.mrf.mxu0
        %v375 = vadd.f32 0.0, %v374
        %376 = vdwg.mxu0
        %377 = vrot.lane.b32.xlu0 %v338, 96
        %v378 = vpop.permute.xlu0 %377
        %v379 = vsel %vm352, %v324, 0
        %v381 = vsel %vm352, %v378, 0
        %383 = vmatpush.xpose.msra.mxu0 0.0
        %384 = vmatpush.xpose.msra.mxu0 0.0
        %385 = vmatpush.xpose.msra.mxu0 0.0
        %386 = vmatpush.xpose.msra.mxu0 0.0
        %387 = vmatpush.xpose.msra.mxu0 0.0
        %388 = vmatpush.xpose.msra.mxu0 0.0
        %389 = vmatpush.xpose.msra.mxu0 0.0
        %390 = vmatpush.xpose.msra.mxu0 0.0
        %391 = vmatpush.xpose.msra.mxu0 0.0
        %392 = vmatpush.xpose.msra.mxu0 0.0
        %393 = vmatpush.xpose.msra.mxu0 0.0
        %394 = vmatpush.xpose.msra.mxu0 0.0
        %395 = vmatpush.xpose.msra.mxu0 0.0
        %396 = vmatpush.xpose.msra.mxu0 0.0
        %397 = vmatpush.xpose.msra.mxu0 0.0
        %398 = vmatpush.xpose.msra.mxu0 %v381
        %399 = vmatmul.f32.gmra.mxu0 %v379
        %v400 = vpop.f32.mrf.mxu0
        %v401 = vadd.f32 0.0, %v400
        %402 = vdwg.mxu0
        %403 = vrot.lane.b32.xlu0 %v340, 96
        %v404 = vpop.permute.xlu0 %403
        %v405 = vsel %vm352, %v326, 0
        %v407 = vsel %vm352, %v404, 0
        %409 = vmatpush.xpose.msra.mxu0 0.0
        %410 = vmatpush.xpose.msra.mxu0 0.0
        %411 = vmatpush.xpose.msra.mxu0 0.0
        %412 = vmatpush.xpose.msra.mxu0 0.0
        %413 = vmatpush.xpose.msra.mxu0 0.0
        %414 = vmatpush.xpose.msra.mxu0 0.0
        %415 = vmatpush.xpose.msra.mxu0 0.0
        %416 = vmatpush.xpose.msra.mxu0 0.0
        %417 = vmatpush.xpose.msra.mxu0 0.0
        %418 = vmatpush.xpose.msra.mxu0 0.0
        %419 = vmatpush.xpose.msra.mxu0 0.0
        %420 = vmatpush.xpose.msra.mxu0 0.0
        %421 = vmatpush.xpose.msra.mxu0 0.0
        %422 = vmatpush.xpose.msra.mxu0 0.0
        %423 = vmatpush.xpose.msra.mxu0 0.0
        %424 = vmatpush.xpose.msra.mxu0 %v407
        %425 = vmatmul.f32.gmra.mxu0 %v405
        %v426 = vpop.f32.mrf.mxu0
        %v427 = vadd.f32 0.0, %v426
        %428 = vdwg.mxu0
        %429 = vrot.lane.b32.xlu0 %v342, 96
        %v430 = vpop.permute.xlu0 %429
        %v431 = vsel %vm352, %v328, 0
        %v433 = vsel %vm352, %v430, 0
        %435 = vmatpush.xpose.msra.mxu0 0.0
        %436 = vmatpush.xpose.msra.mxu0 0.0
        %437 = vmatpush.xpose.msra.mxu0 0.0
        %438 = vmatpush.xpose.msra.mxu0 0.0
        %439 = vmatpush.xpose.msra.mxu0 0.0
        %440 = vmatpush.xpose.msra.mxu0 0.0
        %441 = vmatpush.xpose.msra.mxu0 0.0
        %442 = vmatpush.xpose.msra.mxu0 0.0
        %443 = vmatpush.xpose.msra.mxu0 0.0
        %444 = vmatpush.xpose.msra.mxu0 0.0
        %445 = vmatpush.xpose.msra.mxu0 0.0
        %446 = vmatpush.xpose.msra.mxu0 0.0
        %447 = vmatpush.xpose.msra.mxu0 0.0
        %448 = vmatpush.xpose.msra.mxu0 0.0
        %449 = vmatpush.xpose.msra.mxu0 0.0
        %450 = vmatpush.xpose.msra.mxu0 %v433
        %451 = vmatmul.f32.gmra.mxu0 %v431
        %v452 = vpop.f32.mrf.mxu0
        %v453 = vadd.f32 0.0, %v452
        %454 = vdwg.mxu0
        %455 = vrot.lane.b32.xlu0 %v318, 96
        %v456 = vpop.permute.xlu0 %455
        %v457 = vsel %vm352, %v321, 0
        %v459 = vsel %vm352, %v456, 0
        %461 = vmatpush.xpose.msra.mxu0 0.0
        %462 = vmatpush.xpose.msra.mxu0 0.0
        %463 = vmatpush.xpose.msra.mxu0 0.0
        %464 = vmatpush.xpose.msra.mxu0 0.0
        %465 = vmatpush.xpose.msra.mxu0 0.0
        %466 = vmatpush.xpose.msra.mxu0 0.0
        %467 = vmatpush.xpose.msra.mxu0 0.0
        %468 = vmatpush.xpose.msra.mxu0 0.0
        %469 = vmatpush.xpose.msra.mxu0 0.0
        %470 = vmatpush.xpose.msra.mxu0 0.0
        %471 = vmatpush.xpose.msra.mxu0 0.0
        %472 = vmatpush.xpose.msra.mxu0 0.0
        %473 = vmatpush.xpose.msra.mxu0 0.0
        %474 = vmatpush.xpose.msra.mxu0 0.0
        %475 = vmatpush.xpose.msra.mxu0 0.0
        %476 = vmatpush.xpose.msra.mxu0 %v459
        %477 = vmatmul.f32.gmra.mxu0 %v457
        %v478 = vpop.f32.mrf.mxu0
        %v479 = vadd.f32 0.0, %v478
        %480 = vdwg.mxu0
        %481 = vrot.lane.b32.xlu0 %v345, 96
        %v482 = vpop.permute.xlu0 %481
        %v483 = vsel %vm352, %v331, 0
        %v485 = vsel %vm352, %v482, 0
        %487 = vmatpush.xpose.msra.mxu0 0.0
        %488 = vmatpush.xpose.msra.mxu0 0.0
        %489 = vmatpush.xpose.msra.mxu0 0.0
        %490 = vmatpush.xpose.msra.mxu0 0.0
        %491 = vmatpush.xpose.msra.mxu0 0.0
        %492 = vmatpush.xpose.msra.mxu0 0.0
        %493 = vmatpush.xpose.msra.mxu0 0.0
        %494 = vmatpush.xpose.msra.mxu0 0.0
        %495 = vmatpush.xpose.msra.mxu0 0.0
        %496 = vmatpush.xpose.msra.mxu0 0.0
        %497 = vmatpush.xpose.msra.mxu0 0.0
        %498 = vmatpush.xpose.msra.mxu0 0.0
        %499 = vmatpush.xpose.msra.mxu0 0.0
        %500 = vmatpush.xpose.msra.mxu0 0.0
        %501 = vmatpush.xpose.msra.mxu0 0.0
        %502 = vmatpush.xpose.msra.mxu0 %v485
        %503 = vmatmul.f32.gmra.mxu0 %v483
        %v504 = vpop.f32.mrf.mxu0
        %v505 = vadd.f32 0.0, %v504
        %506 = vdwg.mxu0
        %507 = vrot.lane.b32.xlu0 %v347, 96
        %v508 = vpop.permute.xlu0 %507
        %v509 = vsel %vm352, %v333, 0
        %v511 = vsel %vm352, %v508, 0
        %513 = vmatpush.xpose.msra.mxu0 0.0
        %514 = vmatpush.xpose.msra.mxu0 0.0
        %515 = vmatpush.xpose.msra.mxu0 0.0
        %516 = vmatpush.xpose.msra.mxu0 0.0
        %517 = vmatpush.xpose.msra.mxu0 0.0
        %518 = vmatpush.xpose.msra.mxu0 0.0
        %519 = vmatpush.xpose.msra.mxu0 0.0
        %520 = vmatpush.xpose.msra.mxu0 0.0
        %521 = vmatpush.xpose.msra.mxu0 0.0
        %522 = vmatpush.xpose.msra.mxu0 0.0
        %523 = vmatpush.xpose.msra.mxu0 0.0
        %524 = vmatpush.xpose.msra.mxu0 0.0
        %525 = vmatpush.xpose.msra.mxu0 0.0
        %526 = vmatpush.xpose.msra.mxu0 0.0
        %527 = vmatpush.xpose.msra.mxu0 0.0
        %528 = vmatpush.xpose.msra.mxu0 %v511
        %529 = vmatmul.f32.gmra.mxu0 %v509
        %v530 = vpop.f32.mrf.mxu0
        %v531 = vadd.f32 0.0, %v530
        %532 = vdwg.mxu0
        %533 = vrot.lane.b32.xlu0 %v349, 96
        %v534 = vpop.permute.xlu0 %533
        %v535 = vsel %vm352, %v335, 0
        %v537 = vsel %vm352, %v534, 0
        %539 = vmatpush.xpose.msra.mxu0 0.0
        %540 = vmatpush.xpose.msra.mxu0 0.0
        %541 = vmatpush.xpose.msra.mxu0 0.0
        %542 = vmatpush.xpose.msra.mxu0 0.0
        %543 = vmatpush.xpose.msra.mxu0 0.0
        %544 = vmatpush.xpose.msra.mxu0 0.0
        %545 = vmatpush.xpose.msra.mxu0 0.0
        %546 = vmatpush.xpose.msra.mxu0 0.0
        %547 = vmatpush.xpose.msra.mxu0 0.0
        %548 = vmatpush.xpose.msra.mxu0 0.0
        %549 = vmatpush.xpose.msra.mxu0 0.0
        %550 = vmatpush.xpose.msra.mxu0 0.0
        %551 = vmatpush.xpose.msra.mxu0 0.0
        %552 = vmatpush.xpose.msra.mxu0 0.0
        %553 = vmatpush.xpose.msra.mxu0 0.0
        %554 = vmatpush.xpose.msra.mxu0 %v537
        %555 = vmatmul.f32.gmra.mxu0 %v535
        %v556 = vpop.f32.mrf.mxu0
        %v557 = vadd.f32 0.0, %v556
        %558 = vdwg.mxu0
        %v559 = vsel %vm352, %v375, -inf
        %560 = vmax.xlane.f32.xlu0 %v559
        %v561 = vpop.xlane.xlu0 %560
        %v562 = vsel %vm352, %v401, -inf
        %563 = vmax.xlane.f32.xlu0 %v562
        %v564 = vpop.xlane.xlu0 %563
        %v565 = vsel %vm352, %v427, -inf
        %566 = vmax.xlane.f32.xlu0 %v565
        %v567 = vpop.xlane.xlu0 %566
        %v568 = vsel %vm352, %v453, -inf
        %569 = vmax.xlane.f32.xlu0 %v568
        %v570 = vpop.xlane.xlu0 %569
        %v571 = vsel %vm352, %v479, -inf
        %572 = vmax.xlane.f32.xlu0 %v571
        %v573 = vpop.xlane.xlu0 %572
        %v574 = vsel %vm352, %v505, -inf
        %575 = vmax.xlane.f32.xlu0 %v574
        %v576 = vpop.xlane.xlu0 %575
        %v577 = vsel %vm352, %v531, -inf
        %578 = vmax.xlane.f32.xlu0 %v577
        %v579 = vpop.xlane.xlu0 %578
        %v580 = vsel %vm352, %v557, -inf
        %581 = vmax.xlane.f32.xlu0 %v580
        %v582 = vpop.xlane.xlu0 %581
        %v583 = vsub.f32 %v375, %v561
        %v584 = vsub.f32 %v401, %v564
        %v585 = vsub.f32 %v427, %v567
        %v586 = vsub.f32 %v453, %v570
        %v587 = vsub.f32 %v479, %v573
        %v588 = vsub.f32 %v505, %v576
        %v589 = vsub.f32 %v531, %v579
        %v590 = vsub.f32 %v557, %v582
        %v591 = vmul.f32 %v583, 1.442695
        %v592 = vpow.pop %v591
        %v593 = vmul.f32 %v584, 1.442695
        %v594 = vpow.pop %v593
        %v595 = vmul.f32 %v585, 1.442695
        %v596 = vpow.pop %v595
        %v597 = vmul.f32 %v586, 1.442695
        %v598 = vpow.pop %v597
        %v599 = vmul.f32 %v587, 1.442695
        %v600 = vpow.pop %v599
        %v601 = vmul.f32 %v588, 1.442695
        %v602 = vpow.pop %v601
        %v603 = vmul.f32 %v589, 1.442695
        %v604 = vpow.pop %v603
        %v605 = vmul.f32 %v590, 1.442695
        %v606 = vpow.pop %v605
        %v607 = vsel %vm352, %v592, 0.0
        %608 = vadd.xlane.f32.xlu0 %v607
        %v609 = vpop.xlane.xlu0 %608
        %v610 = vsel %vm352, %v594, 0.0
        %611 = vadd.xlane.f32.xlu0 %v610
        %v612 = vpop.xlane.xlu0 %611
        %v613 = vsel %vm352, %v596, 0.0
        %614 = vadd.xlane.f32.xlu0 %v613
        %v615 = vpop.xlane.xlu0 %614
        %v616 = vsel %vm352, %v598, 0.0
        %617 = vadd.xlane.f32.xlu0 %v616
        %v618 = vpop.xlane.xlu0 %617
        %v619 = vsel %vm352, %v600, 0.0
        %620 = vadd.xlane.f32.xlu0 %v619
        %v621 = vpop.xlane.xlu0 %620
        %v622 = vsel %vm352, %v602, 0.0
        %623 = vadd.xlane.f32.xlu0 %v622
        %v624 = vpop.xlane.xlu0 %623
        %v625 = vsel %vm352, %v604, 0.0
        %626 = vadd.xlane.f32.xlu0 %v625
        %v627 = vpop.xlane.xlu0 %626
        %v628 = vsel %vm352, %v606, 0.0
        %629 = vadd.xlane.f32.xlu0 %v628
        %v630 = vpop.xlane.xlu0 %629
        %v631 = vrcp.pop %v609
        %v632 = vrcp.pop %v612
        %v633 = vrcp.pop %v615
        %v634 = vrcp.pop %v618
        %v635 = vrcp.pop %v621
        %v636 = vrcp.pop %v624
        %v637 = vrcp.pop %v627
        %v638 = vrcp.pop %v630
        %v639 = vmul.f32 %v592, %v631
        %v640 = vmul.f32 %v594, %v632
        %v641 = vmul.f32 %v596, %v633
        %v642 = vmul.f32 %v598, %v634
        %v643 = vmul.f32 %v600, %v635
        %v644 = vmul.f32 %v602, %v636
        %v645 = vmul.f32 %v604, %v637
        %v646 = vmul.f32 %v606, %v638
        %647 = vrot.lane.b32.xlu0 %v315, 64
        %v648 = vpop.permute.xlu0 %647
        %v651 = vsel %vm352, %v639, 0
        %653 = vmatpush.msra.mxu0 0.0
        %654 = vmatpush.msra.mxu0 0.0
        %655 = vmatpush.msra.mxu0 0.0
        %656 = vmatpush.msra.mxu0 0.0
        %657 = vmatpush.msra.mxu0 0.0
        %658 = vmatpush.msra.mxu0 0.0
        %659 = vmatpush.msra.mxu0 0.0
        %660 = vmatpush.msra.mxu0 0.0
        %661 = vmatpush.msra.mxu0 0.0
        %662 = vmatpush.msra.mxu0 0.0
        %663 = vmatpush.msra.mxu0 0.0
        %664 = vmatpush.msra.mxu0 0.0
        %665 = vmatpush.msra.mxu0 0.0
        %666 = vmatpush.msra.mxu0 0.0
        %667 = vmatpush.msra.mxu0 0.0
        %668 = vmatpush.msra.mxu0 %v648
        %669 = vmatmul.f32.gmra.mxu0 %v651
        %v670 = vpop.f32.mrf.mxu0
        %v671 = vadd.f32 0.0, %v670
        %672 = vdwg.mxu0
        %673 = vrot.lane.b32.xlu0 %v338, 64
        %v674 = vpop.permute.xlu0 %673
        %v677 = vsel %vm352, %v640, 0
        %679 = vmatpush.msra.mxu0 0.0
        %680 = vmatpush.msra.mxu0 0.0
        %681 = vmatpush.msra.mxu0 0.0
        %682 = vmatpush.msra.mxu0 0.0
        %683 = vmatpush.msra.mxu0 0.0
        %684 = vmatpush.msra.mxu0 0.0
        %685 = vmatpush.msra.mxu0 0.0
        %686 = vmatpush.msra.mxu0 0.0
        %687 = vmatpush.msra.mxu0 0.0
        %688 = vmatpush.msra.mxu0 0.0
        %689 = vmatpush.msra.mxu0 0.0
        %690 = vmatpush.msra.mxu0 0.0
        %691 = vmatpush.msra.mxu0 0.0
        %692 = vmatpush.msra.mxu0 0.0
        %693 = vmatpush.msra.mxu0 0.0
        %694 = vmatpush.msra.mxu0 %v674
        %695 = vmatmul.f32.gmra.mxu0 %v677
        %v696 = vpop.f32.mrf.mxu0
        %v697 = vadd.f32 0.0, %v696
        %698 = vdwg.mxu0
        %699 = vrot.lane.b32.xlu0 %v340, 64
        %v700 = vpop.permute.xlu0 %699
        %v703 = vsel %vm352, %v641, 0
        %705 = vmatpush.msra.mxu0 0.0
        %706 = vmatpush.msra.mxu0 0.0
        %707 = vmatpush.msra.mxu0 0.0
        %708 = vmatpush.msra.mxu0 0.0
        %709 = vmatpush.msra.mxu0 0.0
        %710 = vmatpush.msra.mxu0 0.0
        %711 = vmatpush.msra.mxu0 0.0
        %712 = vmatpush.msra.mxu0 0.0
        %713 = vmatpush.msra.mxu0 0.0
        %714 = vmatpush.msra.mxu0 0.0
        %715 = vmatpush.msra.mxu0 0.0
        %716 = vmatpush.msra.mxu0 0.0
        %717 = vmatpush.msra.mxu0 0.0
        %718 = vmatpush.msra.mxu0 0.0
        %719 = vmatpush.msra.mxu0 0.0
        %720 = vmatpush.msra.mxu0 %v700
        %721 = vmatmul.f32.gmra.mxu0 %v703
        %v722 = vpop.f32.mrf.mxu0
        %v723 = vadd.f32 0.0, %v722
        %724 = vdwg.mxu0
        %725 = vrot.lane.b32.xlu0 %v342, 64
        %v726 = vpop.permute.xlu0 %725
        %v729 = vsel %vm352, %v642, 0
        %731 = vmatpush.msra.mxu0 0.0
        %732 = vmatpush.msra.mxu0 0.0
        %733 = vmatpush.msra.mxu0 0.0
        %734 = vmatpush.msra.mxu0 0.0
        %735 = vmatpush.msra.mxu0 0.0
        %736 = vmatpush.msra.mxu0 0.0
        %737 = vmatpush.msra.mxu0 0.0
        %738 = vmatpush.msra.mxu0 0.0
        %739 = vmatpush.msra.mxu0 0.0
        %740 = vmatpush.msra.mxu0 0.0
        %741 = vmatpush.msra.mxu0 0.0
        %742 = vmatpush.msra.mxu0 0.0
        %743 = vmatpush.msra.mxu0 0.0
        %744 = vmatpush.msra.mxu0 0.0
        %745 = vmatpush.msra.mxu0 0.0
        %746 = vmatpush.msra.mxu0 %v726
        %747 = vmatmul.f32.gmra.mxu0 %v729
        %v748 = vpop.f32.mrf.mxu0
        %v749 = vadd.f32 0.0, %v748
        %750 = vdwg.mxu0
        %751 = vrot.lane.b32.xlu0 %v318, 64
        %v752 = vpop.permute.xlu0 %751
        %v755 = vsel %vm352, %v643, 0
        %757 = vmatpush.msra.mxu0 0.0
        %758 = vmatpush.msra.mxu0 0.0
        %759 = vmatpush.msra.mxu0 0.0
        %760 = vmatpush.msra.mxu0 0.0
        %761 = vmatpush.msra.mxu0 0.0
        %762 = vmatpush.msra.mxu0 0.0
        %763 = vmatpush.msra.mxu0 0.0
        %764 = vmatpush.msra.mxu0 0.0
        %765 = vmatpush.msra.mxu0 0.0
        %766 = vmatpush.msra.mxu0 0.0
        %767 = vmatpush.msra.mxu0 0.0
        %768 = vmatpush.msra.mxu0 0.0
        %769 = vmatpush.msra.mxu0 0.0
        %770 = vmatpush.msra.mxu0 0.0
        %771 = vmatpush.msra.mxu0 0.0
        %772 = vmatpush.msra.mxu0 %v752
        %773 = vmatmul.f32.gmra.mxu0 %v755
        %v774 = vpop.f32.mrf.mxu0
        %v775 = vadd.f32 0.0, %v774
        %776 = vdwg.mxu0
        %777 = vrot.lane.b32.xlu0 %v345, 64
        %v778 = vpop.permute.xlu0 %777
        %v781 = vsel %vm352, %v644, 0
        %783 = vmatpush.msra.mxu0 0.0
        %784 = vmatpush.msra.mxu0 0.0
        %785 = vmatpush.msra.mxu0 0.0
        %786 = vmatpush.msra.mxu0 0.0
        %787 = vmatpush.msra.mxu0 0.0
        %788 = vmatpush.msra.mxu0 0.0
        %789 = vmatpush.msra.mxu0 0.0
        %790 = vmatpush.msra.mxu0 0.0
        %791 = vmatpush.msra.mxu0 0.0
        %792 = vmatpush.msra.mxu0 0.0
        %793 = vmatpush.msra.mxu0 0.0
        %794 = vmatpush.msra.mxu0 0.0
        %795 = vmatpush.msra.mxu0 0.0
        %796 = vmatpush.msra.mxu0 0.0
        %797 = vmatpush.msra.mxu0 0.0
        %798 = vmatpush.msra.mxu0 %v778
        %799 = vmatmul.f32.gmra.mxu0 %v781
        %v800 = vpop.f32.mrf.mxu0
        %v801 = vadd.f32 0.0, %v800
        %802 = vdwg.mxu0
        %803 = vrot.lane.b32.xlu0 %v347, 64
        %v804 = vpop.permute.xlu0 %803
        %v807 = vsel %vm352, %v645, 0
        %809 = vmatpush.msra.mxu0 0.0
        %810 = vmatpush.msra.mxu0 0.0
        %811 = vmatpush.msra.mxu0 0.0
        %812 = vmatpush.msra.mxu0 0.0
        %813 = vmatpush.msra.mxu0 0.0
        %814 = vmatpush.msra.mxu0 0.0
        %815 = vmatpush.msra.mxu0 0.0
        %816 = vmatpush.msra.mxu0 0.0
        %817 = vmatpush.msra.mxu0 0.0
        %818 = vmatpush.msra.mxu0 0.0
        %819 = vmatpush.msra.mxu0 0.0
        %820 = vmatpush.msra.mxu0 0.0
        %821 = vmatpush.msra.mxu0 0.0
        %822 = vmatpush.msra.mxu0 0.0
        %823 = vmatpush.msra.mxu0 0.0
        %824 = vmatpush.msra.mxu0 %v804
        %825 = vmatmul.f32.gmra.mxu0 %v807
        %v826 = vpop.f32.mrf.mxu0
        %v827 = vadd.f32 0.0, %v826
        %828 = vdwg.mxu0
        %829 = vrot.lane.b32.xlu0 %v349, 64
        %v830 = vpop.permute.xlu0 %829
        %v833 = vsel %vm352, %v646, 0
        %835 = vmatpush.msra.mxu0 0.0
        %836 = vmatpush.msra.mxu0 0.0
        %837 = vmatpush.msra.mxu0 0.0
        %838 = vmatpush.msra.mxu0 0.0
        %839 = vmatpush.msra.mxu0 0.0
        %840 = vmatpush.msra.mxu0 0.0
        %841 = vmatpush.msra.mxu0 0.0
        %842 = vmatpush.msra.mxu0 0.0
        %843 = vmatpush.msra.mxu0 0.0
        %844 = vmatpush.msra.mxu0 0.0
        %845 = vmatpush.msra.mxu0 0.0
        %846 = vmatpush.msra.mxu0 0.0
        %847 = vmatpush.msra.mxu0 0.0
        %848 = vmatpush.msra.mxu0 0.0
        %849 = vmatpush.msra.mxu0 0.0
        %850 = vmatpush.msra.mxu0 %v830
        %851 = vmatmul.f32.gmra.mxu0 %v833
        %v852 = vpop.f32.mrf.mxu0
        %v853 = vadd.f32 0.0, %v852
        %854 = vdwg.mxu0
        %856 = vrot.lane.b32.xlu0 %v697, 8
        %v857 = vpop.permute.xlu0 %856
        %860 = vrot.lane.b32.xlu0 %v723, 16
        %v861 = vpop.permute.xlu0 %860
        %864 = vrot.lane.b32.xlu0 %v749, 24
        %v865 = vpop.permute.xlu0 %864
        %v867 = vsel %vm352, %v671, %v857
        %vm868 = vcmask 130048
        %v869 = vsel %vm868, %v867, %v861
        %vm870 = vcmask 195584
        %v871 = vsel %vm870, %v869, %v865
        %873 = vrot.lane.b32.xlu0 %v801, 8
        %v874 = vpop.permute.xlu0 %873
        %877 = vrot.lane.b32.xlu0 %v827, 16
        %v878 = vpop.permute.xlu0 %877
        %881 = vrot.lane.b32.xlu0 %v853, 24
        %v882 = vpop.permute.xlu0 %881
        %v884 = vsel %vm352, %v775, %v874
        %v885 = vsel %vm868, %v884, %v878
        %v886 = vsel %vm870, %v885, %v882
        %v887 = vld [vmem:[#allocation7] sm:$0xff]
        %v888 = vld [vmem:[#allocation7 + $0x8] sm:$0xff]
        %v889 = vld [vmem:[#allocation7 + $0x10] sm:$0xff]
        %v890 = vld [vmem:[#allocation7 + $0x18] sm:$0xff]
        %v891 = vld [vmem:[%s4] sm:$0x1]
        %v893 = vperm.slane %v891, 0
        %v896 = vsel %vm290, %v871, 0
        %v899 = vsel %vm290, %v886, 0
        %901 = vmatpush.msra.mxu0 0.0
        %902 = vmatpush.msra.mxu0 0.0
        %903 = vmatpush.msra.mxu0 0.0
        %904 = vmatpush.msra.mxu0 0.0
        %905 = vmatpush.msra.mxu0 0.0
        %906 = vmatpush.msra.mxu0 0.0
        %907 = vmatpush.msra.mxu0 0.0
        %908 = vmatpush.msra.mxu0 0.0
        %909 = vmatpush.msra.mxu0 0.0
        %910 = vmatpush.msra.mxu0 0.0
        %911 = vmatpush.msra.mxu0 0.0
        %912 = vmatpush.msra.mxu0 0.0
        %913 = vmatpush.msra.mxu0 %v890
        %914 = vmatpush.msra.mxu0 %v889
        %915 = vmatpush.msra.mxu0 %v888
        %916 = vmatpush.msra.mxu0 %v887
        %917 = vmatmul.f32.gmra.mxu0 %v896
        %v918 = vpop.f32.mrf.mxu0
        %v919 = vadd.f32 %v893, %v918
        %920 = vmatmul.f32.gmra.mxu0 %v899
        %v921 = vpop.f32.mrf.mxu0
        %v922 = vadd.f32 %v893, %v921
        %923 = vdwg.mxu0
        %924 = vst.msk [vmem:[%s277] sm:$0xff] %vm290, %v919
        %925 = vst.msk [vmem:[%s277 + $0x8] sm:$0xff] %vm290, %v922
        %s926 = sand.u32 %s141, 1
        %s927 = scalar_lea.sflag [#allocation4], %s926
        %s928 = sand.u32 %s141, 1
        %s929 = smul.addr %s928, 16
        %s930 = scalar_lea.vmem [#allocation8], %s929
        // Predicated region
        $region53: #{tpu_custom_call.1} parent=39 // pred_check
          %p931 = pneg %p151
        $region54: #{tpu_custom_call.1} parent=39 // pred_check_branch
          %933 = sbr.rel (%p931) target = $region56
        $region55: #{tpu_custom_call.1} parent=39 // pred_region
          %s934 = smul.u32 2, %s23
          %936 = vsyncadd %s927, 0
          %s937 = smul.addr %s934, 8
          %s938 = scalar_lea.hbm %s5, %s937
          %s939 = sshll.u32 %s930, 4
          %s940 = int_to_ptr.vmem [resolvable:$true] %s939
          %s941 = sshll.u32 %s938, 4
          %s942 = int_to_ptr.hbm [resolvable:$true] %s941
          %947 = dma.vmem_to_hbm [thread:$0]  %s940, 256, %s942, %s927, 128, 128, 8
        $region56: #{tpu_custom_call.1} parent=39 // pred_fallthru
          _
      $region40: #{tpu_custom_call.1} parent=5 // pred_fallthru
        _
      %p948 = scmp.le.s32.totalorder 2, %s18
      // Predicated region
      $region57: #{tpu_custom_call.1} parent=5 // pred_check
        %p949 = pneg %p948
      $region58: #{tpu_custom_call.1} parent=5 // pred_check_branch
        %951 = sbr.rel (%p949) target = $region60
      $region59: #{tpu_custom_call.1} parent=5 // pred_region
        %s952 = ssub.s32 %s18, 2
        // Predicated region
        $region61: #{tpu_custom_call.1} parent=59 // pred_check
          %p953 = pneg %p157
        $region62: #{tpu_custom_call.1} parent=59 // pred_check_branch
          %955 = sbr.rel (%p953) target = $region64
        $region63: #{tpu_custom_call.1} parent=59 // pred_region
          %s956 = sand.u32 %s142, 1
          %s957 = scalar_lea.sflag [#allocation4], %s956
          %s958 = sand.u32 %s142, 1
          %s959 = smul.addr %s958, 16
          %s960 = scalar_lea.vmem [#allocation8], %s959
          %962 = dma.done %s957, 256
        $region64: #{tpu_custom_call.1} parent=59 // pred_fallthru
          _
      $region60: #{tpu_custom_call.1} parent=5 // pred_fallthru
        _
    $region6: #{tpu_custom_call.1} parent=1 // loop_footer
      %s22 = sadd.s32 1, %s18
    $region7: #{tpu_custom_call.1} parent=1 // loop_footer_branch
      %17 = sbr.rel target = $region3
    $region8: #{tpu_custom_call.1} parent=1 // loop_exit
      _
    %963 = vsyncpa [#allocation3], 1
    %s964 = scalar_lea.sflag [#allocation3], 1
    %965 = vsyncpa %s964, 1
    %966 = vsyncpa [#allocation6], 1
    %967 = vsyncpa [#allocation4], 1
    %s968 = scalar_lea.sflag [#allocation4], 1
    %969 = vsyncpa %s968, 1

</llo_original>
